<compile_context>
chip_gen: v6e
topology: v6e:2x2x1
jax: 0.10.0
libtpu: 0.0.40
codegen_flags: <defaults>
</compile_context>

<pallas_src>
import numpy as np
import jax
import jax.numpy as jnp
from jax.experimental import pallas as pl
from jax.experimental.pallas import tpu as pltpu

# ----------------------------- model config ---------------------------------
X_DIM = (1, 16, 16)          # (C, H, W)  -- scaled-down MNIST-style CNN
K_SIZE = 3
C_DIMS = (8, 16)
P_SIZES = (2, 2)
H_DIMS = (32,)
Y_DIM = 10
K_MIX = 5
SIG_MIN = 1e-4
SIG_MAX = 10.0
MU_MIN, MU_MAX = -3.0, 3.0
BN_EPS = 1e-5
BATCH = 2

C0, H0, W0 = X_DIM
C1, C2 = C_DIMS
H1, W1 = H0 // 2, W0 // 2              # stage-2 input spatial dims (8, 8)
H2, W2 = H1 // 2, W1 // 2              # stage-2 pooled output dims (4, 4)
HDIM = H_DIMS[0]
FLAT_DIM = C2 * H2 * W2                # 256
HEAD_DIM = K_MIX + K_MIX * Y_DIM + K_MIX   # 60 = [pi | mu | sigma_k]
OUT_LANES = 128                        # lane-dense fused output width

K1 = K_SIZE * (W0 + 2) * C0            # 54   fused-conv contraction, stage 1
K2 = K_SIZE * (W1 + 2) * C1            # 240  fused-conv contraction, stage 2
L1 = W0 * C1                           # 128  conv-out lane width, stage 1
L2 = W1 * C2                           # 128  conv-out lane width, stage 2
GPAD = 16                              # channel axis of the BN group-sum mats


def _pad8(r):
    return ((r + 7) // 8) * 8


# slab_a packing layout (all 128-lane-wide params, 8-row aligned sections)
_A_SECT = (K1, 1, GPAD, K2, 1, GPAD, HDIM, 1)
_offs, _o = [], 0
for _r in _A_SECT:
    _offs.append(_o)
    _o += _pad8(_r)
A_W1, A_B1, A_G1T, A_W2, A_B2, A_G2T, A_WH, A_BH = _offs
A_ROWS = _o                             # 384

_VMEM = pl.BlockSpec(memory_space=pltpu.MemorySpace.VMEM)


# ------------------------- fused in-kernel helpers ---------------------------
def _conv_bn_pool(slab_ref, row_ref, act3d, cin, cout, w,
                  wcat, brow, g, gt, ce):
    """Conv2d(3x3, pad=1) -> BatchNorm2d(train) -> ReLU -> column (W) max-pool.

    act3d    : (N, H, W*cin) lane-dense activation value.
    slab_ref : (N, H, 3*(W+2)*cin) VMEM scratch; the three dy-shifted zero-padded
               copies of the activation are written straight into it so the whole
               3x3 conv is ONE MXU matmul against the banded weight `wcat`.
    row_ref  : (N*H, (W//2)*cout) VMEM scratch; receives the column-pooled rows.
               Row (H) pooling is done by the caller with stride-2 sublane loads.
    """
    n, h, wcin = act3d.shape
    wp_cin = (w + 2) * cin

    # Three dy-shifted zero-padded copies.  The full-slab zero fill provides the
    # halo (the old separate padded scratch and its copies are gone entirely).
    slab_ref[...] = jnp.zeros(slab_ref.shape, jnp.float32)
    o0, o1, o2 = cin, wp_cin + cin, 2 * wp_cin + cin
    slab_ref[:, 1:h, o0:o0 + wcin] = act3d[:, 0:h - 1, :]     # dy = 0 (input row y-1)
    slab_ref[:, 0:h, o1:o1 + wcin] = act3d                    # dy = 1 (input row y)
    slab_ref[:, 0:h - 1, o2:o2 + wcin] = act3d[:, 1:h, :]     # dy = 2 (input row y+1)

    # conv: single MXU matmul (N*H, 3*(W+2)*cin) @ (3*(W+2)*cin, W*cout) + bias
    acc = jnp.dot(slab_ref[...].reshape(n * h, K_SIZE * wp_cin), wcat,
                  preferred_element_type=jnp.float32) + brow

    # BatchNorm2d (training mode: batch stats, biased var, gamma=1, beta=0).
    # Per-channel sums / broadcasts via tiny 0/1 matmuls (no lane-split reshapes).
    inv_cnt = 1.0 / float(n * h * w)                           # trace-time constant
    mean_c = jnp.dot(jnp.sum(acc, axis=0, keepdims=True), g,
                     preferred_element_type=jnp.float32) * inv_cnt
    cent = acc - jnp.dot(mean_c, gt, preferred_element_type=jnp.float32)
    var_c = jnp.dot(jnp.sum(cent * cent, axis=0, keepdims=True), g,
                    preferred_element_type=jnp.float32) * inv_cnt
    inv_lane = jnp.dot(jax.lax.rsqrt(var_c + BN_EPS), gt,
                       preferred_element_type=jnp.float32)
    y = jnp.maximum(cent * inv_lane, 0.0)                      # ReLU

    # Column half of MaxPool2d(2,2): lane roll (XLU, free slot) + max, then ONE
    # even-column 0/1 selection matmul (the even/odd matmul pair is gone).
    lanes = w * cout
    m = jnp.maximum(y, pltpu.roll(y, shift=lanes - cout, axis=1))
    row_ref[...] = jnp.dot(m, ce, preferred_element_type=jnp.float32)


def _mln_kernel(x_ref, a_ref, sel_ref, g_ref, fc_ref, out_ref,
                slab1_ref, slab2_ref, row1_ref, row2_ref):
    n = x_ref.shape[0]

    # ---- stage 1: conv(1->8) + BN + ReLU + column pool ----
    _conv_bn_pool(slab1_ref, row1_ref, x_ref[...], C0, C1, W0,
                  a_ref[A_W1:A_W1 + K1, :], a_ref[A_B1:A_B1 + 1, :],
                  g_ref[0:L1, :], a_ref[A_G1T:A_G1T + GPAD, :],
                  sel_ref[0:L1, :])
    # row half of MaxPool2d(2,2): stride-2 sublane loads (no O(B^2) matrices)
    p1 = jnp.maximum(row1_ref[pl.ds(0, n * H1, stride=2), :],
                     row1_ref[pl.ds(1, n * H1, stride=2), :])   # (N*H1, W1*C1)

    # ---- stage 2: conv(8->16) + BN + ReLU + column pool ----
    _conv_bn_pool(slab2_ref, row2_ref, p1.reshape(n, H1, W1 * C1), C1, C2, W1,
                  a_ref[A_W2:A_W2 + K2, :], a_ref[A_B2:A_B2 + 1, :],
                  g_ref[L1:L1 + L2, :], a_ref[A_G2T:A_G2T + GPAD, :],
                  sel_ref[L1:L1 + L2, :])

    # ---- stage-2 row pool fused with Flatten + Linear(256->32) + ReLU:
    # the NHWC flatten is folded into the FC weight's row blocks, so there is
    # no feature scratch and no per-row masked copies. ----
    blk = W2 * C2                                               # 64 lanes / pooled row
    hfc = jnp.zeros((n, HDIM), jnp.float32)
    for i in range(H2):                                         # static unroll (4)
        pooled = jnp.maximum(row2_ref[pl.ds(2 * i, n, stride=2 * H2), :],
                             row2_ref[pl.ds(2 * i + 1, n, stride=2 * H2), :])
        hfc = hfc + jnp.dot(pooled, fc_ref[i * blk:(i + 1) * blk, :],
                            preferred_element_type=jnp.float32)
    hfc = jnp.maximum(hfc + fc_ref[FLAT_DIM:FLAT_DIM + 1, :], 0.0)

    # ---- MixtureOfLogits head: one fused, lane-padded matmul [pi | mu | sigma]
    # and one lane-dense (N, 128) output slab. ----
    head = jnp.dot(hfc, a_ref[A_WH:A_WH + HDIM, :],
                   preferred_element_type=jnp.float32) + a_ref[A_BH:A_BH + 1, :]
    logits = head[:, 0:K_MIX]
    s = head[:, K_MIX + K_MIX * Y_DIM:HEAD_DIM]
    e = jnp.exp(logits - jnp.max(logits, axis=1, keepdims=True))

    out_ref[...] = head                                          # mu lanes + zero pad
    out_ref[:, 0:K_MIX] = e / jnp.sum(e, axis=1, keepdims=True)  # exact softmax
    # exact sigmoid (EUP exp + one true divide); sigma = sig_min + range*sigmoid
    out_ref[:, K_MIX + K_MIX * Y_DIM:HEAD_DIM] = \
        SIG_MIN + (SIG_MAX - SIG_MIN) / (1.0 + jnp.exp(-s))


# ------------------------------ host wrapper ---------------------------------
def mln_cnn_forward(kp, x_nchw):
    """Forward pass of MixtureLogitNetwork_cnn. x_nchw: (N, C, H, W) float32."""
    n = x_nchw.shape[0]
    # layout plumbing only: NCHW -> NHWC -> lane-dense (N, H, W*C) slab
    x = jnp.transpose(x_nchw.astype(jnp.float32), (0, 2, 3, 1)).reshape(n, H0, W0 * C0)

    out = pl.pallas_call(
        _mln_kernel,
        out_shape=jax.ShapeDtypeStruct((n, OUT_LANES), jnp.float32),
        in_specs=[_VMEM] * 5,
        out_specs=_VMEM,
        scratch_shapes=[
            pltpu.VMEM((n, H0, K1), jnp.float32),          # stage-1 conv slab
            pltpu.VMEM((n, H1, K2), jnp.float32),          # stage-2 conv slab
            pltpu.VMEM((n * H0, W1 * C1), jnp.float32),    # stage-1 col-pooled rows
            pltpu.VMEM((n * H1, W2 * C2), jnp.float32),    # stage-2 col-pooled rows
        ],
        compiler_params=pltpu.CompilerParams(vmem_limit_bytes=4 * 1024 * 1024),
        # TODO(synk): for batch >= 16 on v7x add a batch grid axis with
        # dimension_semantics=("parallel",) so the second TensorCore is used.
    )(x, kp["slab_a"], kp["slab_sel"], kp["slab_g"], kp["slab_fc"])

    pi = out[:, 0:K_MIX]
    mu = out[:, K_MIX:K_MIX + K_MIX * Y_DIM].reshape(n, K_MIX, Y_DIM)
    sig_k = out[:, K_MIX + K_MIX * Y_DIM:HEAD_DIM]
    sigma = jnp.broadcast_to(sig_k[:, :, None], (n, K_MIX, Y_DIM))  # SHARE_SIG=True
    return {"pi": pi, "mu": mu, "sigma": sigma}


# --------------------------- params + prep (host) -----------------------------
def init_params(key):
    """Synthetic parameters matching the module's init_param(): kaiming-normal
    weights, zero biases, fc_mu bias ~ U(mu_min, mu_max).  Conv/FC weights are
    created directly in matmul layout; nn.Flatten's order is folded into the FC
    weight's row order (a permutation of an i.i.d. init, so the forward
    semantics are unchanged; a real checkpoint would be permuted at load time)."""
    def kaiming(k, fan_in, shape):
        return ((2.0 / fan_in) ** 0.5) * jax.random.normal(k, shape, dtype=jnp.float32)

    ks = jax.random.split(key, 7)
    return {
        "w1": kaiming(ks[0], C0 * K_SIZE * K_SIZE, (K_SIZE * K_SIZE, C0, C1)),
        "b1": jnp.zeros((C1,), jnp.float32),
        "w2": kaiming(ks[1], C1 * K_SIZE * K_SIZE, (K_SIZE * K_SIZE, C1, C2)),
        "b2": jnp.zeros((C2,), jnp.float32),
        "wfc": kaiming(ks[2], FLAT_DIM, (FLAT_DIM, HDIM)),
        "bfc": jnp.zeros((HDIM,), jnp.float32),
        "pi_w": kaiming(ks[3], HDIM, (HDIM, K_MIX)),
        "pi_b": jnp.zeros((K_MIX,), jnp.float32),
        "mu_w": kaiming(ks[4], HDIM, (HDIM, K_MIX * Y_DIM)),
        "mu_b": jax.random.uniform(ks[5], (K_MIX * Y_DIM,), jnp.float32, MU_MIN, MU_MAX),
        "sig_w": kaiming(ks[6], HDIM, (HDIM, K_MIX)),       # SHARE_SIG=True
        "sig_b": jnp.zeros((K_MIX,), jnp.float32),
    }


def prep_params(p):
    """One-time folding of all layout transforms into FOUR packed slabs
    (4 HBM->VMEM DMAs instead of 21), all batch-size independent:
      slab_a  (384,128): conv1 banded weight | conv1 bias row | g1^T |
                         conv2 banded weight | conv2 bias row | g2^T |
                         head weight [pi|mu|sig] | head bias   (8-row aligned)
      slab_sel(256, 64): even-column pooling selectors ce1 ; ce2
      slab_g  (256, 16): BN per-channel group-sum matrices g1 ; g2
      slab_fc (264, 32): FC weight (flatten order folded into rows) ; FC bias"""
    def conv_banded(w_taps, W, cin, cout):
        # (3*(W+2)*cin, W*cout): dy-copies stacked along rows, dx shifts folded
        # into a banded block structure -> the whole 3x3 conv is one matmul.
        w_taps = np.asarray(w_taps, np.float32)
        wp = W + 2
        mat = np.zeros((K_SIZE * wp * cin, W * cout), np.float32)
        for dy in range(K_SIZE):
            for dx in range(K_SIZE):
                tap = w_taps[dy * K_SIZE + dx]                 # (cin, cout)
                for w in range(W):
                    r0 = (dy * wp + w + dx) * cin
                    mat[r0:r0 + cin, w * cout:(w + 1) * cout] += tap
        return mat

    def group_sum(W, c):        # (W*c, c): sums the W spatial copies of channel c
        return np.tile(np.eye(c, dtype=np.float32), (W, 1))

    def col_sel_even(W, c):     # (W*c, (W//2)*c): picks even spatial columns
        return np.kron(np.eye(W, dtype=np.float32)[:, 0::2],
                       np.eye(c, dtype=np.float32))

    a = np.zeros((A_ROWS, 128), np.float32)
    a[A_W1:A_W1 + K1] = conv_banded(p["w1"], W0, C0, C1)
    a[A_B1, :] = np.tile(np.asarray(p["b1"], np.float32), W0)
    a[A_G1T:A_G1T + C1] = group_sum(W0, C1).T
    a[A_W2:A_W2 + K2] = conv_banded(p["w2"], W1, C1, C2)
    a[A_B2, :] = np.tile(np.asarray(p["b2"], np.float32), W1)
    a[A_G2T:A_G2T + C2] = group_sum(W1, C2).T
    a[A_WH:A_WH + HDIM, :HEAD_DIM] = np.concatenate(
        [np.asarray(p["pi_w"]), np.asarray(p["mu_w"]), np.asarray(p["sig_w"])], axis=1)
    a[A_BH, :HEAD_DIM] = np.concatenate(
        [np.asarray(p["pi_b"]), np.asarray(p["mu_b"]), np.asarray(p["sig_b"])])

    sel = np.concatenate([col_sel_even(W0, C1), col_sel_even(W1, C2)], axis=0)

    g = np.zeros((L1 + L2, GPAD), np.float32)
    g[0:L1, :C1] = group_sum(W0, C1)
    g[L1:L1 + L2, :C2] = group_sum(W1, C2)

    fc = np.zeros((_pad8(FLAT_DIM + 1), HDIM), np.float32)
    fc[:FLAT_DIM] = np.asarray(p["wfc"], np.float32)
    fc[FLAT_DIM] = np.asarray(p["bfc"], np.float32)

    return {"slab_a": jnp.asarray(a), "slab_sel": jnp.asarray(sel),
            "slab_g": jnp.asarray(g), "slab_fc": jnp.asarray(fc)}


# --------------------------- pure-JAX reference -------------------------------
def mln_cnn_reference(p, x_nchw):
    """Pure-JAX (XLA) reference used only to validate the Pallas kernel."""
    n = x_nchw.shape[0]
    x = jnp.transpose(x_nchw.astype(jnp.float32), (0, 2, 3, 1))     # NHWC
    for wt, b in ((p["w1"], p["b1"]), (p["w2"], p["b2"])):
        nb, hh, ww, _ = x.shape
        cout = wt.shape[2]
        xp = jnp.pad(x, ((0, 0), (1, 1), (1, 1), (0, 0)))
        y = jnp.broadcast_to(b, (nb, hh, ww, cout))
        for t in range(K_SIZE * K_SIZE):
            dy, dx = divmod(t, K_SIZE)
            y = y + jnp.einsum("nhwc,cd->nhwd",
                               xp[:, dy:dy + hh, dx:dx + ww, :], wt[t])
        mean = jnp.mean(y, axis=(0, 1, 2))
        var = jnp.mean(jnp.square(y - mean), axis=(0, 1, 2))
        y = jnp.maximum((y - mean) * jax.lax.rsqrt(var + BN_EPS), 0.0)
        x = y.reshape(nb, hh // 2, 2, ww // 2, 2, cout).max(axis=(2, 4))
    feat = x.reshape(n, -1)               # NHWC flatten (fc weight rows use this order)
    h = jnp.maximum(feat @ p["wfc"] + p["bfc"], 0.0)
    pi = jax.nn.softmax(h @ p["pi_w"] + p["pi_b"], axis=1)
    mu = (h @ p["mu_w"] + p["mu_b"]).reshape(n, K_MIX, Y_DIM)
    s = h @ p["sig_w"] + p["sig_b"]
    sigma = SIG_MIN + (SIG_MAX - SIG_MIN) * jax.nn.sigmoid(s)
    return {"pi": pi, "mu": mu,
            "sigma": jnp.broadcast_to(sigma[:, :, None], (n, K_MIX, Y_DIM))}


# ----------------------------------- main --------------------------------------
if __name__ == "__main__":
    key = jax.random.PRNGKey(0)
    k_param, k_x = jax.random.split(key)
    params = init_params(k_param)
    kparams = prep_params(params)
    x = jax.random.normal(k_x, (BATCH, C0, H0, W0), dtype=jnp.float32)

    fwd = jax.jit(mln_cnn_forward)
    out = fwd(kparams, x)
    jax.block_until_ready(out)

    # shape / sanity checks
    assert out["pi"].shape == (BATCH, K_MIX)
    assert out["mu"].shape == (BATCH, K_MIX, Y_DIM)
    assert out["sigma"].shape == (BATCH, K_MIX, Y_DIM)
    assert bool(jnp.all(jnp.isfinite(out["pi"])))
    assert bool(jnp.allclose(jnp.sum(out["pi"], axis=1), 1.0, atol=1e-5))
    assert bool(jnp.all(out["sigma"] >= SIG_MIN))

    # numeric check against the pure-JAX reference (sigma is exact now)
    ref = mln_cnn_reference(params, x)
    assert float(jnp.max(jnp.abs(out["pi"] - ref["pi"]))) < 1e-3
    assert float(jnp.max(jnp.abs(out["mu"] - ref["mu"]))) < 3e-3
    assert float(jnp.max(jnp.abs(out["sigma"] - ref["sigma"]))) < 5e-3

    print("KERNEL_OK")
</pallas_src>

<mosaic_0001>
module attributes {stable_mosaic.version = 11 : i64} {
  func.func @_mln_kernel(%arg0: memref<2x16x16xf32, #tpu.memory_space<vmem>>, %arg1: memref<384x128xf32, #tpu.memory_space<vmem>>, %arg2: memref<256x64xf32, #tpu.memory_space<vmem>>, %arg3: memref<256x16xf32, #tpu.memory_space<vmem>>, %arg4: memref<264x32xf32, #tpu.memory_space<vmem>>, %arg5: memref<2x128xf32, #tpu.memory_space<vmem>>, %arg6: memref<2x16x54xf32, #tpu.memory_space<vmem>>, %arg7: memref<2x8x240xf32, #tpu.memory_space<vmem>>, %arg8: memref<32x64xf32, #tpu.memory_space<vmem>>, %arg9: memref<16x64xf32, #tpu.memory_space<vmem>>) attributes {dimension_semantics = [], scalar_prefetch = 0 : i64, scratch_operands = 4 : i64, tpu.core_type = #tpu.core_type<tc>} {
    %c0 = arith.constant 0 : index
    %c0_0 = arith.constant 0 : index
    %c0_1 = arith.constant 0 : index
    %0 = vector.load %arg0[%c0, %c0_0, %c0_1] : memref<2x16x16xf32, #tpu.memory_space<vmem>>, vector<2x16x16xf32>
    %c0_2 = arith.constant 0 : index
    %c0_3 = arith.constant 0 : index
    %1 = vector.load %arg1[%c0_2, %c0_3] : memref<384x128xf32, #tpu.memory_space<vmem>>, vector<54x128xf32>
    %c56 = arith.constant 56 : index
    %c0_4 = arith.constant 0 : index
    %2 = vector.load %arg1[%c56, %c0_4] : memref<384x128xf32, #tpu.memory_space<vmem>>, vector<1x128xf32>
    %c0_5 = arith.constant 0 : index
    %c0_6 = arith.constant 0 : index
    %3 = vector.load %arg3[%c0_5, %c0_6] : memref<256x16xf32, #tpu.memory_space<vmem>>, vector<128x16xf32>
    %c64 = arith.constant 64 : index
    %c0_7 = arith.constant 0 : index
    %4 = vector.load %arg1[%c64, %c0_7] : memref<384x128xf32, #tpu.memory_space<vmem>>, vector<16x128xf32>
    %c0_8 = arith.constant 0 : index
    %c0_9 = arith.constant 0 : index
    %5 = vector.load %arg2[%c0_8, %c0_9] : memref<256x64xf32, #tpu.memory_space<vmem>>, vector<128x64xf32>
    %cst = arith.constant 0.000000e+00 : f32
    %6 = vector.broadcast %cst : f32 to vector<2x16x54xf32>
    %c0_10 = arith.constant 0 : index
    %c0_11 = arith.constant 0 : index
    %c0_12 = arith.constant 0 : index
    %7 = vector.load %arg6[%c0_10, %c0_11, %c0_12] : memref<2x16x54xf32, #tpu.memory_space<vmem>>, vector<2x16x54xf32>
    tpu.vector_store %arg6[%c0_10, %c0_11, %c0_12], %6 {strides = array<i32>} : memref<2x16x54xf32, #tpu.memory_space<vmem>>, vector<2x16x54xf32>,
    %8 = vector.extract_strided_slice %0 {offsets = [0, 0, 0], sizes = [2, 15, 16], strides = [1, 1, 1]} : vector<2x16x16xf32> to vector<2x15x16xf32>
    %c0_13 = arith.constant 0 : index
    %c1 = arith.constant 1 : index
    %c1_14 = arith.constant 1 : index
    %9 = vector.load %arg6[%c0_13, %c1, %c1_14] : memref<2x16x54xf32, #tpu.memory_space<vmem>>, vector<2x15x16xf32>
    tpu.vector_store %arg6[%c0_13, %c1, %c1_14], %8 {strides = array<i32>} : memref<2x16x54xf32, #tpu.memory_space<vmem>>, vector<2x15x16xf32>,
    %c0_15 = arith.constant 0 : index
    %c0_16 = arith.constant 0 : index
    %c19 = arith.constant 19 : index
    %10 = vector.load %arg6[%c0_15, %c0_16, %c19] : memref<2x16x54xf32, #tpu.memory_space<vmem>>, vector<2x16x16xf32>
    tpu.vector_store %arg6[%c0_15, %c0_16, %c19], %0 {strides = array<i32>} : memref<2x16x54xf32, #tpu.memory_space<vmem>>, vector<2x16x16xf32>,
    %11 = vector.extract_strided_slice %0 {offsets = [0, 1, 0], sizes = [2, 15, 16], strides = [1, 1, 1]} : vector<2x16x16xf32> to vector<2x15x16xf32>
    %c0_17 = arith.constant 0 : index
    %c0_18 = arith.constant 0 : index
    %c37 = arith.constant 37 : index
    %12 = vector.load %arg6[%c0_17, %c0_18, %c37] : memref<2x16x54xf32, #tpu.memory_space<vmem>>, vector<2x15x16xf32>
    tpu.vector_store %arg6[%c0_17, %c0_18, %c37], %11 {strides = array<i32>} : memref<2x16x54xf32, #tpu.memory_space<vmem>>, vector<2x15x16xf32>,
    %c0_19 = arith.constant 0 : index
    %c0_20 = arith.constant 0 : index
    %c0_21 = arith.constant 0 : index
    %13 = vector.load %arg6[%c0_19, %c0_20, %c0_21] : memref<2x16x54xf32, #tpu.memory_space<vmem>>, vector<2x16x54xf32>
    %14 = vector.shape_cast %13 : vector<2x16x54xf32> to vector<32x54xf32>
    %cst_22 = arith.constant dense<0.000000e+00> : vector<32x128xf32>
    %15 = tpu.matmul %14, %1, %cst_22 {dimension_numbers = #tpu.dot_dimension_numbers<[1], [0], [0], [1], [0, 0, 1, 1], [], []>} : vector<32x54xf32>, vector<54x128xf32>, vector<32x128xf32> -> vector<32x128xf32>
    %16 = vector.broadcast %2 : vector<1x128xf32> to vector<32x128xf32>
    %17 = arith.addf %15, %16 : vector<32x128xf32>
    %cst_23 = arith.constant dense<0.000000e+00> : vector<128xf32>
    %18 = vector.multi_reduction <add>, %17, %cst_23 [0] : vector<32x128xf32> to vector<128xf32>
    %19 = vector.shape_cast %18 : vector<128xf32> to vector<1x128xf32>
    %cst_24 = arith.constant dense<0.000000e+00> : vector<1x16xf32>
    %20 = tpu.matmul %19, %3, %cst_24 {dimension_numbers = #tpu.dot_dimension_numbers<[1], [0], [0], [1], [0, 0, 1, 1], [], []>} : vector<1x128xf32>, vector<128x16xf32>, vector<1x16xf32> -> vector<1x16xf32>
    %cst_25 = arith.constant 0.001953125 : f32
    %21 = vector.broadcast %cst_25 : f32 to vector<1x16xf32>
    %22 = arith.mulf %20, %21 : vector<1x16xf32>
    %cst_26 = arith.constant dense<0.000000e+00> : vector<1x128xf32>
    %23 = tpu.matmul %22, %4, %cst_26 {dimension_numbers = #tpu.dot_dimension_numbers<[1], [0], [0], [1], [0, 0, 1, 1], [], []>} : vector<1x16xf32>, vector<16x128xf32>, vector<1x128xf32> -> vector<1x128xf32>
    %24 = vector.broadcast %23 : vector<1x128xf32> to vector<32x128xf32>
    %25 = arith.subf %17, %24 : vector<32x128xf32>
    %26 = arith.mulf %25, %25 : vector<32x128xf32>
    %cst_27 = arith.constant dense<0.000000e+00> : vector<128xf32>
    %27 = vector.multi_reduction <add>, %26, %cst_27 [0] : vector<32x128xf32> to vector<128xf32>
    %28 = vector.shape_cast %27 : vector<128xf32> to vector<1x128xf32>
    %cst_28 = arith.constant dense<0.000000e+00> : vector<1x16xf32>
    %29 = tpu.matmul %28, %3, %cst_28 {dimension_numbers = #tpu.dot_dimension_numbers<[1], [0], [0], [1], [0, 0, 1, 1], [], []>} : vector<1x128xf32>, vector<128x16xf32>, vector<1x16xf32> -> vector<1x16xf32>
    %cst_29 = arith.constant 0.001953125 : f32
    %30 = vector.broadcast %cst_29 : f32 to vector<1x16xf32>
    %31 = arith.mulf %29, %30 : vector<1x16xf32>
    %cst_30 = arith.constant 9.99999974E-6 : f32
    %32 = vector.broadcast %cst_30 : f32 to vector<1x16xf32>
    %33 = arith.addf %31, %32 : vector<1x16xf32>
    %34 = math.rsqrt %33 : vector<1x16xf32>
    %cst_31 = arith.constant dense<0.000000e+00> : vector<1x128xf32>
    %35 = tpu.matmul %34, %4, %cst_31 {dimension_numbers = #tpu.dot_dimension_numbers<[1], [0], [0], [1], [0, 0, 1, 1], [], []>} : vector<1x16xf32>, vector<16x128xf32>, vector<1x128xf32> -> vector<1x128xf32>
    %36 = vector.broadcast %35 : vector<1x128xf32> to vector<32x128xf32>
    %37 = arith.mulf %25, %36 : vector<32x128xf32>
    %cst_32 = arith.constant 0.000000e+00 : f32
    %38 = vector.broadcast %cst_32 : f32 to vector<32x128xf32>
    %39 = arith.maximumf %37, %38 : vector<32x128xf32>
    %c120_i32 = arith.constant 120 : i32
    %40 = tpu.dynamic_rotate %39 by %c120_i32 dim 1 : vector<32x128xf32>, i32 -> vector<32x128xf32>
    %41 = arith.maximumf %39, %40 : vector<32x128xf32>
    %cst_33 = arith.constant dense<0.000000e+00> : vector<32x64xf32>
    %42 = tpu.matmul %41, %5, %cst_33 {dimension_numbers = #tpu.dot_dimension_numbers<[1], [0], [0], [1], [0, 0, 1, 1], [], []>} : vector<32x128xf32>, vector<128x64xf32>, vector<32x64xf32> -> vector<32x64xf32>
    %c0_34 = arith.constant 0 : index
    %c0_35 = arith.constant 0 : index
    %43 = vector.load %arg8[%c0_34, %c0_35] : memref<32x64xf32, #tpu.memory_space<vmem>>, vector<32x64xf32>
    tpu.vector_store %arg8[%c0_34, %c0_35], %42 {strides = array<i32>} : memref<32x64xf32, #tpu.memory_space<vmem>>, vector<32x64xf32>,
    %c0_36 = arith.constant 0 : index
    %c0_37 = arith.constant 0 : index
    %44 = tpu.strided_load %arg8[%c0_36, %c0_37] {strides = array<i32: 2, 1>} : memref<32x64xf32, #tpu.memory_space<vmem>>, vector<16x64xf32>
    %c1_38 = arith.constant 1 : index
    %c0_39 = arith.constant 0 : index
    %45 = tpu.strided_load %arg8[%c1_38, %c0_39] {strides = array<i32: 2, 1>} : memref<32x64xf32, #tpu.memory_space<vmem>>, vector<16x64xf32>
    %46 = arith.maximumf %44, %45 : vector<16x64xf32>
    %47 = vector.shape_cast %46 : vector<16x64xf32> to vector<2x8x64xf32>
    %c80 = arith.constant 80 : index
    %c0_40 = arith.constant 0 : index
    %48 = vector.load %arg1[%c80, %c0_40] : memref<384x128xf32, #tpu.memory_space<vmem>>, vector<240x128xf32>
    %c320 = arith.constant 320 : index
    %c0_41 = arith.constant 0 : index
    %49 = vector.load %arg1[%c320, %c0_41] : memref<384x128xf32, #tpu.memory_space<vmem>>, vector<1x128xf32>
    %c128 = arith.constant 128 : index
    %c0_42 = arith.constant 0 : index
    %50 = vector.load %arg3[%c128, %c0_42] : memref<256x16xf32, #tpu.memory_space<vmem>>, vector<128x16xf32>
    %c328 = arith.constant 328 : index
    %c0_43 = arith.constant 0 : index
    %51 = vector.load %arg1[%c328, %c0_43] : memref<384x128xf32, #tpu.memory_space<vmem>>, vector<16x128xf32>
    %c128_44 = arith.constant 128 : index
    %c0_45 = arith.constant 0 : index
    %52 = vector.load %arg2[%c128_44, %c0_45] : memref<256x64xf32, #tpu.memory_space<vmem>>, vector<128x64xf32>
    %cst_46 = arith.constant 0.000000e+00 : f32
    %53 = vector.broadcast %cst_46 : f32 to vector<2x8x240xf32>
    %c0_47 = arith.constant 0 : index
    %c0_48 = arith.constant 0 : index
    %c0_49 = arith.constant 0 : index
    %54 = vector.load %arg7[%c0_47, %c0_48, %c0_49] : memref<2x8x240xf32, #tpu.memory_space<vmem>>, vector<2x8x240xf32>
    tpu.vector_store %arg7[%c0_47, %c0_48, %c0_49], %53 {strides = array<i32>} : memref<2x8x240xf32, #tpu.memory_space<vmem>>, vector<2x8x240xf32>,
    %55 = vector.extract_strided_slice %47 {offsets = [0, 0, 0], sizes = [2, 7, 64], strides = [1, 1, 1]} : vector<2x8x64xf32> to vector<2x7x64xf32>
    %c0_50 = arith.constant 0 : index
    %c1_51 = arith.constant 1 : index
    %c8 = arith.constant 8 : index
    %56 = vector.load %arg7[%c0_50, %c1_51, %c8] : memref<2x8x240xf32, #tpu.memory_space<vmem>>, vector<2x7x64xf32>
    tpu.vector_store %arg7[%c0_50, %c1_51, %c8], %55 {strides = array<i32>} : memref<2x8x240xf32, #tpu.memory_space<vmem>>, vector<2x7x64xf32>,
    %c0_52 = arith.constant 0 : index
    %c0_53 = arith.constant 0 : index
    %c88 = arith.constant 88 : index
    %57 = vector.load %arg7[%c0_52, %c0_53, %c88] : memref<2x8x240xf32, #tpu.memory_space<vmem>>, vector<2x8x64xf32>
    tpu.vector_store %arg7[%c0_52, %c0_53, %c88], %47 {strides = array<i32>} : memref<2x8x240xf32, #tpu.memory_space<vmem>>, vector<2x8x64xf32>,
    %58 = vector.extract_strided_slice %47 {offsets = [0, 1, 0], sizes = [2, 7, 64], strides = [1, 1, 1]} : vector<2x8x64xf32> to vector<2x7x64xf32>
    %c0_54 = arith.constant 0 : index
    %c0_55 = arith.constant 0 : index
    %c168 = arith.constant 168 : index
    %59 = vector.load %arg7[%c0_54, %c0_55, %c168] : memref<2x8x240xf32, #tpu.memory_space<vmem>>, vector<2x7x64xf32>
    tpu.vector_store %arg7[%c0_54, %c0_55, %c168], %58 {strides = array<i32>} : memref<2x8x240xf32, #tpu.memory_space<vmem>>, vector<2x7x64xf32>,
    %c0_56 = arith.constant 0 : index
    %c0_57 = arith.constant 0 : index
    %c0_58 = arith.constant 0 : index
    %60 = vector.load %arg7[%c0_56, %c0_57, %c0_58] : memref<2x8x240xf32, #tpu.memory_space<vmem>>, vector<2x8x240xf32>
    %61 = vector.shape_cast %60 : vector<2x8x240xf32> to vector<16x240xf32>
    %cst_59 = arith.constant dense<0.000000e+00> : vector<16x128xf32>
    %62 = tpu.matmul %61, %48, %cst_59 {dimension_numbers = #tpu.dot_dimension_numbers<[1], [0], [0], [1], [0, 0, 1, 1], [], []>} : vector<16x240xf32>, vector<240x128xf32>, vector<16x128xf32> -> vector<16x128xf32>
    %63 = vector.broadcast %49 : vector<1x128xf32> to vector<16x128xf32>
    %64 = arith.addf %62, %63 : vector<16x128xf32>
    %cst_60 = arith.constant dense<0.000000e+00> : vector<128xf32>
    %65 = vector.multi_reduction <add>, %64, %cst_60 [0] : vector<16x128xf32> to vector<128xf32>
    %66 = vector.shape_cast %65 : vector<128xf32> to vector<1x128xf32>
    %cst_61 = arith.constant dense<0.000000e+00> : vector<1x16xf32>
    %67 = tpu.matmul %66, %50, %cst_61 {dimension_numbers = #tpu.dot_dimension_numbers<[1], [0], [0], [1], [0, 0, 1, 1], [], []>} : vector<1x128xf32>, vector<128x16xf32>, vector<1x16xf32> -> vector<1x16xf32>
    %cst_62 = arith.constant 7.812500e-03 : f32
    %68 = vector.broadcast %cst_62 : f32 to vector<1x16xf32>
    %69 = arith.mulf %67, %68 : vector<1x16xf32>
    %cst_63 = arith.constant dense<0.000000e+00> : vector<1x128xf32>
    %70 = tpu.matmul %69, %51, %cst_63 {dimension_numbers = #tpu.dot_dimension_numbers<[1], [0], [0], [1], [0, 0, 1, 1], [], []>} : vector<1x16xf32>, vector<16x128xf32>, vector<1x128xf32> -> vector<1x128xf32>
    %71 = vector.broadcast %70 : vector<1x128xf32> to vector<16x128xf32>
    %72 = arith.subf %64, %71 : vector<16x128xf32>
    %73 = arith.mulf %72, %72 : vector<16x128xf32>
    %cst_64 = arith.constant dense<0.000000e+00> : vector<128xf32>
    %74 = vector.multi_reduction <add>, %73, %cst_64 [0] : vector<16x128xf32> to vector<128xf32>
    %75 = vector.shape_cast %74 : vector<128xf32> to vector<1x128xf32>
    %cst_65 = arith.constant dense<0.000000e+00> : vector<1x16xf32>
    %76 = tpu.matmul %75, %50, %cst_65 {dimension_numbers = #tpu.dot_dimension_numbers<[1], [0], [0], [1], [0, 0, 1, 1], [], []>} : vector<1x128xf32>, vector<128x16xf32>, vector<1x16xf32> -> vector<1x16xf32>
    %cst_66 = arith.constant 7.812500e-03 : f32
    %77 = vector.broadcast %cst_66 : f32 to vector<1x16xf32>
    %78 = arith.mulf %76, %77 : vector<1x16xf32>
    %cst_67 = arith.constant 9.99999974E-6 : f32
    %79 = vector.broadcast %cst_67 : f32 to vector<1x16xf32>
    %80 = arith.addf %78, %79 : vector<1x16xf32>
    %81 = math.rsqrt %80 : vector<1x16xf32>
    %cst_68 = arith.constant dense<0.000000e+00> : vector<1x128xf32>
    %82 = tpu.matmul %81, %51, %cst_68 {dimension_numbers = #tpu.dot_dimension_numbers<[1], [0], [0], [1], [0, 0, 1, 1], [], []>} : vector<1x16xf32>, vector<16x128xf32>, vector<1x128xf32> -> vector<1x128xf32>
    %83 = vector.broadcast %82 : vector<1x128xf32> to vector<16x128xf32>
    %84 = arith.mulf %72, %83 : vector<16x128xf32>
    %cst_69 = arith.constant 0.000000e+00 : f32
    %85 = vector.broadcast %cst_69 : f32 to vector<16x128xf32>
    %86 = arith.maximumf %84, %85 : vector<16x128xf32>
    %c112_i32 = arith.constant 112 : i32
    %87 = tpu.dynamic_rotate %86 by %c112_i32 dim 1 : vector<16x128xf32>, i32 -> vector<16x128xf32>
    %88 = arith.maximumf %86, %87 : vector<16x128xf32>
    %cst_70 = arith.constant dense<0.000000e+00> : vector<16x64xf32>
    %89 = tpu.matmul %88, %52, %cst_70 {dimension_numbers = #tpu.dot_dimension_numbers<[1], [0], [0], [1], [0, 0, 1, 1], [], []>} : vector<16x128xf32>, vector<128x64xf32>, vector<16x64xf32> -> vector<16x64xf32>
    %c0_71 = arith.constant 0 : index
    %c0_72 = arith.constant 0 : index
    %90 = vector.load %arg9[%c0_71, %c0_72] : memref<16x64xf32, #tpu.memory_space<vmem>>, vector<16x64xf32>
    tpu.vector_store %arg9[%c0_71, %c0_72], %89 {strides = array<i32>} : memref<16x64xf32, #tpu.memory_space<vmem>>, vector<16x64xf32>,
    %cst_73 = arith.constant 0.000000e+00 : f32
    %91 = vector.broadcast %cst_73 : f32 to vector<2x32xf32>
    %c0_74 = arith.constant 0 : index
    %c0_75 = arith.constant 0 : index
    %92 = tpu.strided_load %arg9[%c0_74, %c0_75] {strides = array<i32: 8, 1>} : memref<16x64xf32, #tpu.memory_space<vmem>>, vector<2x64xf32>
    %c1_76 = arith.constant 1 : index
    %c0_77 = arith.constant 0 : index
    %93 = tpu.strided_load %arg9[%c1_76, %c0_77] {strides = array<i32: 8, 1>} : memref<16x64xf32, #tpu.memory_space<vmem>>, vector<2x64xf32>
    %94 = arith.maximumf %92, %93 : vector<2x64xf32>
    %c0_78 = arith.constant 0 : index
    %c0_79 = arith.constant 0 : index
    %95 = vector.load %arg4[%c0_78, %c0_79] : memref<264x32xf32, #tpu.memory_space<vmem>>, vector<64x32xf32>
    %cst_80 = arith.constant dense<0.000000e+00> : vector<2x32xf32>
    %96 = tpu.matmul %94, %95, %cst_80 {dimension_numbers = #tpu.dot_dimension_numbers<[1], [0], [0], [1], [0, 0, 1, 1], [], []>} : vector<2x64xf32>, vector<64x32xf32>, vector<2x32xf32> -> vector<2x32xf32>
    %97 = arith.addf %91, %96 : vector<2x32xf32>
    %c2 = arith.constant 2 : index
    %c0_81 = arith.constant 0 : index
    %98 = tpu.strided_load %arg9[%c2, %c0_81] {strides = array<i32: 8, 1>} : memref<16x64xf32, #tpu.memory_space<vmem>>, vector<2x64xf32>
    %c3 = arith.constant 3 : index
    %c0_82 = arith.constant 0 : index
    %99 = tpu.strided_load %arg9[%c3, %c0_82] {strides = array<i32: 8, 1>} : memref<16x64xf32, #tpu.memory_space<vmem>>, vector<2x64xf32>
    %100 = arith.maximumf %98, %99 : vector<2x64xf32>
    %c64_83 = arith.constant 64 : index
    %c0_84 = arith.constant 0 : index
    %101 = vector.load %arg4[%c64_83, %c0_84] : memref<264x32xf32, #tpu.memory_space<vmem>>, vector<64x32xf32>
    %cst_85 = arith.constant dense<0.000000e+00> : vector<2x32xf32>
    %102 = tpu.matmul %100, %101, %cst_85 {dimension_numbers = #tpu.dot_dimension_numbers<[1], [0], [0], [1], [0, 0, 1, 1], [], []>} : vector<2x64xf32>, vector<64x32xf32>, vector<2x32xf32> -> vector<2x32xf32>
    %103 = arith.addf %97, %102 : vector<2x32xf32>
    %c4 = arith.constant 4 : index
    %c0_86 = arith.constant 0 : index
    %104 = tpu.strided_load %arg9[%c4, %c0_86] {strides = array<i32: 8, 1>} : memref<16x64xf32, #tpu.memory_space<vmem>>, vector<2x64xf32>
    %c5 = arith.constant 5 : index
    %c0_87 = arith.constant 0 : index
    %105 = tpu.strided_load %arg9[%c5, %c0_87] {strides = array<i32: 8, 1>} : memref<16x64xf32, #tpu.memory_space<vmem>>, vector<2x64xf32>
    %106 = arith.maximumf %104, %105 : vector<2x64xf32>
    %c128_88 = arith.constant 128 : index
    %c0_89 = arith.constant 0 : index
    %107 = vector.load %arg4[%c128_88, %c0_89] : memref<264x32xf32, #tpu.memory_space<vmem>>, vector<64x32xf32>
    %cst_90 = arith.constant dense<0.000000e+00> : vector<2x32xf32>
    %108 = tpu.matmul %106, %107, %cst_90 {dimension_numbers = #tpu.dot_dimension_numbers<[1], [0], [0], [1], [0, 0, 1, 1], [], []>} : vector<2x64xf32>, vector<64x32xf32>, vector<2x32xf32> -> vector<2x32xf32>
    %109 = arith.addf %103, %108 : vector<2x32xf32>
    %c6 = arith.constant 6 : index
    %c0_91 = arith.constant 0 : index
    %110 = tpu.strided_load %arg9[%c6, %c0_91] {strides = array<i32: 8, 1>} : memref<16x64xf32, #tpu.memory_space<vmem>>, vector<2x64xf32>
    %c7 = arith.constant 7 : index
    %c0_92 = arith.constant 0 : index
    %111 = tpu.strided_load %arg9[%c7, %c0_92] {strides = array<i32: 8, 1>} : memref<16x64xf32, #tpu.memory_space<vmem>>, vector<2x64xf32>
    %112 = arith.maximumf %110, %111 : vector<2x64xf32>
    %c192 = arith.constant 192 : index
    %c0_93 = arith.constant 0 : index
    %113 = vector.load %arg4[%c192, %c0_93] : memref<264x32xf32, #tpu.memory_space<vmem>>, vector<64x32xf32>
    %cst_94 = arith.constant dense<0.000000e+00> : vector<2x32xf32>
    %114 = tpu.matmul %112, %113, %cst_94 {dimension_numbers = #tpu.dot_dimension_numbers<[1], [0], [0], [1], [0, 0, 1, 1], [], []>} : vector<2x64xf32>, vector<64x32xf32>, vector<2x32xf32> -> vector<2x32xf32>
    %115 = arith.addf %109, %114 : vector<2x32xf32>
    %c256 = arith.constant 256 : index
    %c0_95 = arith.constant 0 : index
    %116 = vector.load %arg4[%c256, %c0_95] : memref<264x32xf32, #tpu.memory_space<vmem>>, vector<1x32xf32>
    %117 = vector.broadcast %116 : vector<1x32xf32> to vector<2x32xf32>
    %118 = arith.addf %115, %117 : vector<2x32xf32>
    %cst_96 = arith.constant 0.000000e+00 : f32
    %119 = vector.broadcast %cst_96 : f32 to vector<2x32xf32>
    %120 = arith.maximumf %118, %119 : vector<2x32xf32>
    %c344 = arith.constant 344 : index
    %c0_97 = arith.constant 0 : index
    %121 = vector.load %arg1[%c344, %c0_97] : memref<384x128xf32, #tpu.memory_space<vmem>>, vector<32x128xf32>
    %cst_98 = arith.constant dense<0.000000e+00> : vector<2x128xf32>
    %122 = tpu.matmul %120, %121, %cst_98 {dimension_numbers = #tpu.dot_dimension_numbers<[1], [0], [0], [1], [0, 0, 1, 1], [], []>} : vector<2x32xf32>, vector<32x128xf32>, vector<2x128xf32> -> vector<2x128xf32>
    %c376 = arith.constant 376 : index
    %c0_99 = arith.constant 0 : index
    %123 = vector.load %arg1[%c376, %c0_99] : memref<384x128xf32, #tpu.memory_space<vmem>>, vector<1x128xf32>
    %124 = vector.broadcast %123 : vector<1x128xf32> to vector<2x128xf32>
    %125 = arith.addf %122, %124 : vector<2x128xf32>
    %126 = vector.extract_strided_slice %125 {offsets = [0, 0], sizes = [2, 5], strides = [1, 1]} : vector<2x128xf32> to vector<2x5xf32>
    %127 = vector.extract_strided_slice %125 {offsets = [0, 55], sizes = [2, 5], strides = [1, 1]} : vector<2x128xf32> to vector<2x5xf32>
    %cst_100 = arith.constant dense<0xFF800000> : vector<2xf32>
    %128 = vector.multi_reduction <maximumf>, %126, %cst_100 [1] : vector<2x5xf32> to vector<2xf32>
    %129 = vector.shape_cast %128 : vector<2xf32> to vector<2x1xf32>
    %130 = vector.broadcast %129 : vector<2x1xf32> to vector<2x5xf32>
    %131 = arith.subf %126, %130 : vector<2x5xf32>
    %132 = math.exp %131 : vector<2x5xf32>
    %c0_101 = arith.constant 0 : index
    %c0_102 = arith.constant 0 : index
    %133 = vector.load %arg5[%c0_101, %c0_102] : memref<2x128xf32, #tpu.memory_space<vmem>>, vector<2x128xf32>
    tpu.vector_store %arg5[%c0_101, %c0_102], %125 {strides = array<i32>} : memref<2x128xf32, #tpu.memory_space<vmem>>, vector<2x128xf32>,
    %cst_103 = arith.constant dense<0.000000e+00> : vector<2xf32>
    %134 = vector.multi_reduction <add>, %132, %cst_103 [1] : vector<2x5xf32> to vector<2xf32>
    %135 = vector.shape_cast %134 : vector<2xf32> to vector<2x1xf32>
    %136 = vector.broadcast %135 : vector<2x1xf32> to vector<2x5xf32>
    %137 = arith.divf %132, %136 : vector<2x5xf32>
    %c0_104 = arith.constant 0 : index
    %c0_105 = arith.constant 0 : index
    %138 = vector.load %arg5[%c0_104, %c0_105] : memref<2x128xf32, #tpu.memory_space<vmem>>, vector<2x5xf32>
    tpu.vector_store %arg5[%c0_104, %c0_105], %137 {strides = array<i32>} : memref<2x128xf32, #tpu.memory_space<vmem>>, vector<2x5xf32>,
    %cst_106 = arith.constant 0.000000e+00 : f32
    %139 = vector.broadcast %cst_106 : f32 to vector<2x5xf32>
    %140 = arith.subf %139, %127 : vector<2x5xf32>
    %141 = math.exp %140 : vector<2x5xf32>
    %cst_107 = arith.constant 1.000000e+00 : f32
    %142 = vector.broadcast %cst_107 : f32 to vector<2x5xf32>
    %143 = arith.addf %142, %141 : vector<2x5xf32>
    %cst_108 = arith.constant 9.99989986 : f32
    %144 = vector.broadcast %cst_108 : f32 to vector<2x5xf32>
    %145 = arith.divf %144, %143 : vector<2x5xf32>
    %cst_109 = arith.constant 9.99999974E-5 : f32
    %146 = vector.broadcast %cst_109 : f32 to vector<2x5xf32>
    %147 = arith.addf %146, %145 : vector<2x5xf32>
    %c0_110 = arith.constant 0 : index
    %c55 = arith.constant 55 : index
    %148 = vector.load %arg5[%c0_110, %c55] : memref<2x128xf32, #tpu.memory_space<vmem>>, vector<2x5xf32>
    tpu.vector_store %arg5[%c0_110, %c55], %147 {strides = array<i32>} : memref<2x128xf32, #tpu.memory_space<vmem>>, vector<2x5xf32>,
    return
  }
}

</mosaic_0001>

<llo_original>
// kernel: mln_cnn_forward.1
$region0: #{mln_cnn_forward.1}
  #allocation0 [shape = 'u32[]', space=smem, size = 0x4, offset = 0x4, fixed_abs, tag = 'smem constant byte address 0x4 - core index']
  #allocation1 [shape = 'u32[144,128]{1,0:T(1,128)}', space=vmem, size = 0x12000, scoped, tag = 'internal scratch']
  #allocation2 [shape = 'f32[2,16,54]{2,1,0:T(8,128)}', space=vmem, size = 0x4000, scoped, tag = 'scratch operand']
  #allocation3 [shape = 'f32[2,8,240]{2,1,0:T(8,128)}', space=vmem, size = 0x4000, scoped, tag = 'scratch operand']
  #allocation4 [shape = 'f32[32,64]{1,0:T(8,128)}', space=vmem, size = 0x4000, scoped, tag = 'scratch operand']
  #allocation5 [shape = 'f32[16,64]{1,0:T(8,128)}', space=vmem, size = 0x2000, scoped, tag = 'scratch operand']
  %s0 = inlined_call_operand.vmem [shape: f32[2,16,16], index: 0, kind: input, shape index: {}]
  %s1 = inlined_call_operand.vmem [shape: f32[384,128], index: 1, kind: input, shape index: {}]
  %s2 = inlined_call_operand.vmem [shape: f32[256,64], index: 2, kind: input, shape index: {}]
  %s3 = inlined_call_operand.vmem [shape: f32[256,16], index: 3, kind: input, shape index: {}]
  %s4 = inlined_call_operand.vmem [shape: f32[264,32], index: 4, kind: input, shape index: {}]
  %s5 = inlined_call_operand.vmem [shape: f32[2,128], index: 5, kind: output, shape index: {}]
  %s6 = sld [smem:[#allocation0]]
  $region30: #{mln_cnn_forward.1} parent=0
    _
  %s8 = ssub.s32 1, %s6
  %s9 = scalar_select 0, %s8, %s6
  // Predicated region
  $region2: #{mln_cnn_forward.1} parent=0 // pred_check
    _
  $region3: #{mln_cnn_forward.1} parent=0 // pred_check_branch
    %11 = sbr.rel (0) target = $region5
  $region4: #{mln_cnn_forward.1} parent=0 // pred_region
    _
  $region5: #{mln_cnn_forward.1} parent=0 // pred_fallthru
    _
  // Predicated region
  $region6: #{mln_cnn_forward.1} parent=0 // pred_check
    _
  $region7: #{mln_cnn_forward.1} parent=0 // pred_check_branch
    %13 = sbr.rel (0) target = $region9
  $region8: #{mln_cnn_forward.1} parent=0 // pred_region
    _
  $region9: #{mln_cnn_forward.1} parent=0 // pred_fallthru
    _
  // Predicated region
  $region10: #{mln_cnn_forward.1} parent=0 // pred_check
    _
  $region11: #{mln_cnn_forward.1} parent=0 // pred_check_branch
    %15 = sbr.rel (0) target = $region13
  $region12: #{mln_cnn_forward.1} parent=0 // pred_region
    _
  $region13: #{mln_cnn_forward.1} parent=0 // pred_fallthru
    _
  // Predicated region
  $region14: #{mln_cnn_forward.1} parent=0 // pred_check
    _
  $region15: #{mln_cnn_forward.1} parent=0 // pred_check_branch
    %17 = sbr.rel (0) target = $region17
  $region16: #{mln_cnn_forward.1} parent=0 // pred_region
    _
  $region17: #{mln_cnn_forward.1} parent=0 // pred_fallthru
    _
  // Predicated region
  $region18: #{mln_cnn_forward.1} parent=0 // pred_check
    _
  $region19: #{mln_cnn_forward.1} parent=0 // pred_check_branch
    %19 = sbr.rel (0) target = $region21
  $region20: #{mln_cnn_forward.1} parent=0 // pred_region
    _
  $region21: #{mln_cnn_forward.1} parent=0 // pred_fallthru
    _
  %v20 = vld [vmem:[%s0] sm:$0xff]
  %v21 = vld [vmem:[%s0 + $0x8] sm:$0xff]
  %v22 = vld [vmem:[%s0 + $0x10] sm:$0xff]
  %v23 = vld [vmem:[%s0 + $0x18] sm:$0xff]
  %v24 = vld [vmem:[%s1] sm:$0xff]
  %v25 = vld [vmem:[%s1 + $0x8] sm:$0xff]
  %v26 = vld [vmem:[%s1 + $0x10] sm:$0xff]
  %v27 = vld [vmem:[%s1 + $0x18] sm:$0xff]
  %v28 = vld [vmem:[%s1 + $0x20] sm:$0xff]
  %v29 = vld [vmem:[%s1 + $0x28] sm:$0xff]
  %v30 = vld [vmem:[%s1 + $0x30] sm:$0x3f]
  %v31 = vld [vmem:[%s1 + $0x38] sm:$0x1]
  %v32 = vld [vmem:[%s3] sm:$0xff]
  %v33 = vld [vmem:[%s3 + $0x8] sm:$0xff]
  %v34 = vld [vmem:[%s3 + $0x10] sm:$0xff]
  %v35 = vld [vmem:[%s3 + $0x18] sm:$0xff]
  %v36 = vld [vmem:[%s3 + $0x20] sm:$0xff]
  %v37 = vld [vmem:[%s3 + $0x28] sm:$0xff]
  %v38 = vld [vmem:[%s3 + $0x30] sm:$0xff]
  %v39 = vld [vmem:[%s3 + $0x38] sm:$0xff]
  %v40 = vld [vmem:[%s3 + $0x40] sm:$0xff]
  %v41 = vld [vmem:[%s3 + $0x48] sm:$0xff]
  %v42 = vld [vmem:[%s3 + $0x50] sm:$0xff]
  %v43 = vld [vmem:[%s3 + $0x58] sm:$0xff]
  %v44 = vld [vmem:[%s3 + $0x60] sm:$0xff]
  %v45 = vld [vmem:[%s3 + $0x68] sm:$0xff]
  %v46 = vld [vmem:[%s3 + $0x70] sm:$0xff]
  %v47 = vld [vmem:[%s3 + $0x78] sm:$0xff]
  %v48 = vld [vmem:[%s1 + $0x40] sm:$0xff]
  %v49 = vld [vmem:[%s1 + $0x48] sm:$0xff]
  %v50 = vld [vmem:[%s2] sm:$0xff]
  %v51 = vld [vmem:[%s2 + $0x8] sm:$0xff]
  %v52 = vld [vmem:[%s2 + $0x10] sm:$0xff]
  %v53 = vld [vmem:[%s2 + $0x18] sm:$0xff]
  %v54 = vld [vmem:[%s2 + $0x20] sm:$0xff]
  %v55 = vld [vmem:[%s2 + $0x28] sm:$0xff]
  %v56 = vld [vmem:[%s2 + $0x30] sm:$0xff]
  %v57 = vld [vmem:[%s2 + $0x38] sm:$0xff]
  %v58 = vld [vmem:[%s2 + $0x40] sm:$0xff]
  %v59 = vld [vmem:[%s2 + $0x48] sm:$0xff]
  %v60 = vld [vmem:[%s2 + $0x50] sm:$0xff]
  %v61 = vld [vmem:[%s2 + $0x58] sm:$0xff]
  %v62 = vld [vmem:[%s2 + $0x60] sm:$0xff]
  %v63 = vld [vmem:[%s2 + $0x68] sm:$0xff]
  %v64 = vld [vmem:[%s2 + $0x70] sm:$0xff]
  %v65 = vld [vmem:[%s2 + $0x78] sm:$0xff]
  %vm66 = vcmask 441344
  %67 = vst.msk [vmem:[#allocation2] sm:$0xff] %vm66, 0.0
  %68 = vst.msk [vmem:[#allocation2 + $0x8] sm:$0xff] %vm66, 0.0
  %69 = vst.msk [vmem:[#allocation2 + $0x10] sm:$0xff] %vm66, 0.0
  %70 = vst.msk [vmem:[#allocation2 + $0x18] sm:$0xff] %vm66, 0.0
  %75 = vrot.lane.b32.xlu0 %v20, 1
  %v76 = vpop.permute.xlu0 %75
  %77 = vrot.lane.b32.xlu0 %v21, 1
  %v78 = vpop.permute.xlu0 %77
  %79 = vrot.lane.b32.xlu0 %v22, 1
  %v80 = vpop.permute.xlu0 %79
  %81 = vrot.lane.b32.xlu0 %v23, 1
  %v82 = vpop.permute.xlu0 %81
  %vm87 = vcmask 138248
  %88 = vst.msk [vmem:[#allocation2 + $0x1] sm:$0xff] %vm87, %v76
  %vm89 = vcmask 137224
  %90 = vst.msk [vmem:[#allocation2 + $0x9] sm:$0x7f] %vm89, %v78
  %91 = vst.msk [vmem:[#allocation2 + $0x11] sm:$0xff] %vm87, %v80
  %92 = vst.msk [vmem:[#allocation2 + $0x19] sm:$0x7f] %vm89, %v82
  %93 = vrot.lane.b32.xlu0 %v20, 19
  %v94 = vpop.permute.xlu0 %93
  %95 = vrot.lane.b32.xlu0 %v21, 19
  %v96 = vpop.permute.xlu0 %95
  %97 = vrot.lane.b32.xlu0 %v22, 19
  %v98 = vpop.permute.xlu0 %97
  %99 = vrot.lane.b32.xlu0 %v23, 19
  %v100 = vpop.permute.xlu0 %99
  %vm105 = vcmask 285848
  %106 = vst.msk [vmem:[#allocation2] sm:$0xff] %vm105, %v94
  %107 = vst.msk [vmem:[#allocation2 + $0x8] sm:$0xff] %vm105, %v96
  %108 = vst.msk [vmem:[#allocation2 + $0x10] sm:$0xff] %vm105, %v98
  %109 = vst.msk [vmem:[#allocation2 + $0x18] sm:$0xff] %vm105, %v100
  %110 = vrot.lane.b32.xlu0 %v20, 37
  %v111 = vpop.permute.xlu0 %110
  %112 = vrot.lane.b32.xlu0 %v21, 37
  %v113 = vpop.permute.xlu0 %112
  %114 = vrot.lane.b32.xlu0 %v22, 37
  %v115 = vpop.permute.xlu0 %114
  %116 = vrot.lane.b32.xlu0 %v23, 37
  %v117 = vpop.permute.xlu0 %116
  %vm122 = vcmask 433449
  %123 = vst.msk [vmem:[#allocation2 - $0x1] sm:$0xfe] %vm122, %v111
  %vm124 = vcmask 433448
  %125 = vst.msk [vmem:[#allocation2 + $0x7] sm:$0xff] %vm124, %v113
  %126 = vst.msk [vmem:[#allocation2 + $0xf] sm:$0xfe] %vm122, %v115
  %127 = vst.msk [vmem:[#allocation2 + $0x17] sm:$0xff] %vm124, %v117
  %v128 = vld [vmem:[#allocation2] sm:$0xff]
  %v129 = vld [vmem:[#allocation2 + $0x8] sm:$0xff]
  %v130 = vld [vmem:[#allocation2 + $0x10] sm:$0xff]
  %v131 = vld [vmem:[#allocation2 + $0x18] sm:$0xff]
  %v132 = vlaneseq
  %v133 = vshrl.u32 %v132, 7
  %v134 = vsub.s32 0, %v133
  %v135 = vrot.slane %v31, %v134
  %v137 = vsel %vm66, %v128, 0
  %v140 = vsel %vm66, %v129, 0
  %v143 = vsel %vm66, %v130, 0
  %v146 = vsel %vm66, %v131, 0
  %vm148 = vcmask 1045504
  %v150 = vsel %vm148, %v30, 0
  %152 = vmatprep.subr.mxu0 0.0
  %153 = vmatpush1.msra.mxu0 0.0
  %154 = vmatprep.subr.mxu0 0.0
  %155 = vmatpush1.msra.mxu0 0.0
  %156 = vmatprep.subr.mxu0 0.0
  %157 = vmatpush1.msra.mxu0 0.0
  %158 = vmatprep.subr.mxu0 0.0
  %159 = vmatpush1.msra.mxu0 0.0
  %160 = vmatprep.subr.mxu0 0.0
  %161 = vmatpush1.msra.mxu0 0.0
  %162 = vmatprep.subr.mxu0 0.0
  %163 = vmatpush1.msra.mxu0 0.0
  %164 = vmatprep.subr.mxu0 0.0
  %165 = vmatpush1.msra.mxu0 0.0
  %166 = vmatprep.subr.mxu0 0.0
  %167 = vmatpush1.msra.mxu0 0.0
  %168 = vmatprep.subr.mxu0 0.0
  %169 = vmatpush1.msra.mxu0 0.0
  %170 = vmatprep.subr.mxu0 0.0
  %171 = vmatpush1.msra.mxu0 %v150
  %172 = vmatprep.subr.mxu0 0.0
  %173 = vmatpush1.msra.mxu0 %v29
  %174 = vmatprep.subr.mxu0 0.0
  %175 = vmatpush1.msra.mxu0 %v28
  %176 = vmatprep.subr.mxu0 0.0
  %177 = vmatpush1.msra.mxu0 %v27
  %178 = vmatprep.subr.mxu0 0.0
  %179 = vmatpush1.msra.mxu0 %v26
  %180 = vmatprep.subr.mxu0 0.0
  %181 = vmatpush1.msra.mxu0 %v25
  %182 = vmatprep.subr.mxu0 0.0
  %183 = vmatpush1.msra.mxu0 %v24
  %184 = vmatprep.subr.mxu0 0.0
  %185 = vmatpush2.msra.mxu0 0.0
  %186 = vmatprep.subr.mxu0 0.0
  %187 = vmatpush2.msra.mxu0 0.0
  %188 = vmatprep.subr.mxu0 0.0
  %189 = vmatpush2.msra.mxu0 0.0
  %190 = vmatprep.subr.mxu0 0.0
  %191 = vmatpush2.msra.mxu0 0.0
  %192 = vmatprep.subr.mxu0 0.0
  %193 = vmatpush2.msra.mxu0 0.0
  %194 = vmatprep.subr.mxu0 0.0
  %195 = vmatpush2.msra.mxu0 0.0
  %196 = vmatprep.subr.mxu0 0.0
  %197 = vmatpush2.msra.mxu0 0.0
  %198 = vmatprep.subr.mxu0 0.0
  %199 = vmatpush2.msra.mxu0 0.0
  %200 = vmatprep.subr.mxu0 0.0
  %201 = vmatpush2.msra.mxu0 0.0
  %202 = vmatprep.subr.mxu0 0.0
  %203 = vmatpush2.msra.mxu0 0.0
  %204 = vmatprep.subr.mxu0 0.0
  %205 = vmatpush2.msra.mxu0 0.0
  %206 = vmatprep.subr.mxu0 0.0
  %207 = vmatpush2.msra.mxu0 0.0
  %208 = vmatprep.subr.mxu0 0.0
  %209 = vmatpush2.msra.mxu0 0.0
  %210 = vmatprep.subr.mxu0 0.0
  %211 = vmatpush2.msra.mxu0 0.0
  %212 = vmatprep.subr.mxu0 0.0
  %213 = vmatpush2.msra.mxu0 0.0
  %214 = vmatprep.subr.mxu0 0.0
  %215 = vmatpush2.msra.mxu0 0.0
  %216 = vmatprep.mubr.f32.mxu0 0.0
  %217 = vmatmul.mubr.f32.gmra.mxu0 %v137
  %v218 = vpop.f32.mrf.mxu0
  %v219 = vadd.f32 %v135, %v218
  %v220 = vpop.f32.mrf.mxu0
  %221 = vmatprep.mubr.f32.mxu0 0.0
  %222 = vmatmul.mubr.f32.gmra.mxu0 %v140
  %v223 = vpop.f32.mrf.mxu0
  %v224 = vadd.f32 %v135, %v223
  %v225 = vpop.f32.mrf.mxu0
  %226 = vmatprep.mubr.f32.mxu0 0.0
  %227 = vmatmul.mubr.f32.gmra.mxu0 %v143
  %v228 = vpop.f32.mrf.mxu0
  %v229 = vadd.f32 %v135, %v228
  %v230 = vpop.f32.mrf.mxu0
  %231 = vmatprep.mubr.f32.mxu0 0.0
  %232 = vmatmul.mubr.f32.gmra.mxu0 %v146
  %v233 = vpop.f32.mrf.mxu0
  %v234 = vadd.f32 %v135, %v233
  %v235 = vpop.f32.mrf.mxu0
  %236 = vdwg.mxu0
  %v237 = vadd.f32 %v219, %v224
  %v238 = vadd.f32 %v237, %v229
  %v239 = vadd.f32 %v238, %v234
  %v240 = vrot.slane %v239, 4
  %v241 = vadd.f32 %v239, %v240
  %v242 = vrot.slane %v241, 2
  %v243 = vadd.f32 %v241, %v242
  %v244 = vrot.slane %v243, 1
  %v245 = vadd.f32 %v243, %v244
  %246 = vmatprep.subr.mxu0 0.0
  %247 = vmatpush1.msra.mxu0 %v47
  %248 = vmatprep.subr.mxu0 0.0
  %249 = vmatpush1.msra.mxu0 %v46
  %250 = vmatprep.subr.mxu0 0.0
  %251 = vmatpush1.msra.mxu0 %v45
  %252 = vmatprep.subr.mxu0 0.0
  %253 = vmatpush1.msra.mxu0 %v44
  %254 = vmatprep.subr.mxu0 0.0
  %255 = vmatpush1.msra.mxu0 %v43
  %256 = vmatprep.subr.mxu0 0.0
  %257 = vmatpush1.msra.mxu0 %v42
  %258 = vmatprep.subr.mxu0 0.0
  %259 = vmatpush1.msra.mxu0 %v41
  %260 = vmatprep.subr.mxu0 0.0
  %261 = vmatpush1.msra.mxu0 %v40
  %262 = vmatprep.subr.mxu0 0.0
  %263 = vmatpush1.msra.mxu0 %v39
  %264 = vmatprep.subr.mxu0 0.0
  %265 = vmatpush1.msra.mxu0 %v38
  %266 = vmatprep.subr.mxu0 0.0
  %267 = vmatpush1.msra.mxu0 %v37
  %268 = vmatprep.subr.mxu0 0.0
  %269 = vmatpush1.msra.mxu0 %v36
  %270 = vmatprep.subr.mxu0 0.0
  %271 = vmatpush1.msra.mxu0 %v35
  %272 = vmatprep.subr.mxu0 0.0
  %273 = vmatpush1.msra.mxu0 %v34
  %274 = vmatprep.subr.mxu0 0.0
  %275 = vmatpush1.msra.mxu0 %v33
  %276 = vmatprep.subr.mxu0 0.0
  %277 = vmatpush1.msra.mxu0 %v32
  %278 = vmatprep.subr.mxu0 0.0
  %279 = vmatpush2.msra.mxu0 0.0
  %280 = vmatprep.subr.mxu0 0.0
  %281 = vmatpush2.msra.mxu0 0.0
  %282 = vmatprep.subr.mxu0 0.0
  %283 = vmatpush2.msra.mxu0 0.0
  %284 = vmatprep.subr.mxu0 0.0
  %285 = vmatpush2.msra.mxu0 0.0
  %286 = vmatprep.subr.mxu0 0.0
  %287 = vmatpush2.msra.mxu0 0.0
  %288 = vmatprep.subr.mxu0 0.0
  %289 = vmatpush2.msra.mxu0 0.0
  %290 = vmatprep.subr.mxu0 0.0
  %291 = vmatpush2.msra.mxu0 0.0
  %292 = vmatprep.subr.mxu0 0.0
  %293 = vmatpush2.msra.mxu0 0.0
  %294 = vmatprep.subr.mxu0 0.0
  %295 = vmatpush2.msra.mxu0 0.0
  %296 = vmatprep.subr.mxu0 0.0
  %297 = vmatpush2.msra.mxu0 0.0
  %298 = vmatprep.subr.mxu0 0.0
  %299 = vmatpush2.msra.mxu0 0.0
  %300 = vmatprep.subr.mxu0 0.0
  %301 = vmatpush2.msra.mxu0 0.0
  %302 = vmatprep.subr.mxu0 0.0
  %303 = vmatpush2.msra.mxu0 0.0
  %304 = vmatprep.subr.mxu0 0.0
  %305 = vmatpush2.msra.mxu0 0.0
  %306 = vmatprep.subr.mxu0 0.0
  %307 = vmatpush2.msra.mxu0 0.0
  %308 = vmatprep.subr.mxu0 0.0
  %309 = vmatpush2.msra.mxu0 0.0
  %310 = vmatprep.mubr.f32.mxu0 0.0
  %311 = vmatmul.mubr.f32.gmra.mxu0 %v245
  %v312 = vpop.f32.mrf.mxu0
  %v313 = vadd.f32 0.0, %v312
  %v314 = vpop.f32.mrf.mxu0
  %315 = vdwg.mxu0
  %v316 = vmul.f32 %v313, 0.001953125
  %vm317 = vcmask 130048
  %v319 = vsel %vm317, %v316, 0
  %321 = vmatprep.subr.mxu0 0.0
  %322 = vmatpush1.msra.mxu0 0.0
  %323 = vmatprep.subr.mxu0 0.0
  %324 = vmatpush1.msra.mxu0 0.0
  %325 = vmatprep.subr.mxu0 0.0
  %326 = vmatpush1.msra.mxu0 0.0
  %327 = vmatprep.subr.mxu0 0.0
  %328 = vmatpush1.msra.mxu0 0.0
  %329 = vmatprep.subr.mxu0 0.0
  %330 = vmatpush1.msra.mxu0 0.0
  %331 = vmatprep.subr.mxu0 0.0
  %332 = vmatpush1.msra.mxu0 0.0
  %333 = vmatprep.subr.mxu0 0.0
  %334 = vmatpush1.msra.mxu0 0.0
  %335 = vmatprep.subr.mxu0 0.0
  %336 = vmatpush1.msra.mxu0 0.0
  %337 = vmatprep.subr.mxu0 0.0
  %338 = vmatpush1.msra.mxu0 0.0
  %339 = vmatprep.subr.mxu0 0.0
  %340 = vmatpush1.msra.mxu0 0.0
  %341 = vmatprep.subr.mxu0 0.0
  %342 = vmatpush1.msra.mxu0 0.0
  %343 = vmatprep.subr.mxu0 0.0
  %344 = vmatpush1.msra.mxu0 0.0
  %345 = vmatprep.subr.mxu0 0.0
  %346 = vmatpush1.msra.mxu0 0.0
  %347 = vmatprep.subr.mxu0 0.0
  %348 = vmatpush1.msra.mxu0 0.0
  %349 = vmatprep.subr.mxu0 0.0
  %350 = vmatpush1.msra.mxu0 %v49
  %351 = vmatprep.subr.mxu0 0.0
  %352 = vmatpush1.msra.mxu0 %v48
  %353 = vmatprep.subr.mxu0 0.0
  %354 = vmatpush2.msra.mxu0 0.0
  %355 = vmatprep.subr.mxu0 0.0
  %356 = vmatpush2.msra.mxu0 0.0
  %357 = vmatprep.subr.mxu0 0.0
  %358 = vmatpush2.msra.mxu0 0.0
  %359 = vmatprep.subr.mxu0 0.0
  %360 = vmatpush2.msra.mxu0 0.0
  %361 = vmatprep.subr.mxu0 0.0
  %362 = vmatpush2.msra.mxu0 0.0
  %363 = vmatprep.subr.mxu0 0.0
  %364 = vmatpush2.msra.mxu0 0.0
  %365 = vmatprep.subr.mxu0 0.0
  %366 = vmatpush2.msra.mxu0 0.0
  %367 = vmatprep.subr.mxu0 0.0
  %368 = vmatpush2.msra.mxu0 0.0
  %369 = vmatprep.subr.mxu0 0.0
  %370 = vmatpush2.msra.mxu0 0.0
  %371 = vmatprep.subr.mxu0 0.0
  %372 = vmatpush2.msra.mxu0 0.0
  %373 = vmatprep.subr.mxu0 0.0
  %374 = vmatpush2.msra.mxu0 0.0
  %375 = vmatprep.subr.mxu0 0.0
  %376 = vmatpush2.msra.mxu0 0.0
  %377 = vmatprep.subr.mxu0 0.0
  %378 = vmatpush2.msra.mxu0 0.0
  %379 = vmatprep.subr.mxu0 0.0
  %380 = vmatpush2.msra.mxu0 0.0
  %381 = vmatprep.subr.mxu0 0.0
  %382 = vmatpush2.msra.mxu0 0.0
  %383 = vmatprep.subr.mxu0 0.0
  %384 = vmatpush2.msra.mxu0 0.0
  %385 = vmatprep.mubr.f32.mxu0 0.0
  %386 = vmatmul.mubr.f32.gmra.mxu0 %v319
  %v387 = vpop.f32.mrf.mxu0
  %v388 = vadd.f32 0.0, %v387
  %v389 = vpop.f32.mrf.mxu0
  %390 = vdwg.mxu0
  %v391 = vlaneseq
  %v392 = vshrl.u32 %v391, 7
  %v393 = vsub.s32 0, %v392
  %v394 = vrot.slane %v388, %v393
  %v395 = vsub.f32 %v219, %v394
  %v396 = vsub.f32 %v224, %v394
  %v397 = vsub.f32 %v229, %v394
  %v398 = vsub.f32 %v234, %v394
  %v399 = vmul.f32 %v395, %v395
  %v400 = vmul.f32 %v396, %v396
  %v401 = vmul.f32 %v397, %v397
  %v402 = vmul.f32 %v398, %v398
  %v403 = vadd.f32 %v399, %v400
  %v404 = vadd.f32 %v403, %v401
  %v405 = vadd.f32 %v404, %v402
  %v406 = vrot.slane %v405, 4
  %v407 = vadd.f32 %v405, %v406
  %v408 = vrot.slane %v407, 2
  %v409 = vadd.f32 %v407, %v408
  %v410 = vrot.slane %v409, 1
  %v411 = vadd.f32 %v409, %v410
  %412 = vmatprep.subr.mxu0 0.0
  %413 = vmatpush1.msra.mxu0 %v47
  %414 = vmatprep.subr.mxu0 0.0
  %415 = vmatpush1.msra.mxu0 %v46
  %416 = vmatprep.subr.mxu0 0.0
  %417 = vmatpush1.msra.mxu0 %v45
  %418 = vmatprep.subr.mxu0 0.0
  %419 = vmatpush1.msra.mxu0 %v44
  %420 = vmatprep.subr.mxu0 0.0
  %421 = vmatpush1.msra.mxu0 %v43
  %422 = vmatprep.subr.mxu0 0.0
  %423 = vmatpush1.msra.mxu0 %v42
  %424 = vmatprep.subr.mxu0 0.0
  %425 = vmatpush1.msra.mxu0 %v41
  %426 = vmatprep.subr.mxu0 0.0
  %427 = vmatpush1.msra.mxu0 %v40
  %428 = vmatprep.subr.mxu0 0.0
  %429 = vmatpush1.msra.mxu0 %v39
  %430 = vmatprep.subr.mxu0 0.0
  %431 = vmatpush1.msra.mxu0 %v38
  %432 = vmatprep.subr.mxu0 0.0
  %433 = vmatpush1.msra.mxu0 %v37
  %434 = vmatprep.subr.mxu0 0.0
  %435 = vmatpush1.msra.mxu0 %v36
  %436 = vmatprep.subr.mxu0 0.0
  %437 = vmatpush1.msra.mxu0 %v35
  %438 = vmatprep.subr.mxu0 0.0
  %439 = vmatpush1.msra.mxu0 %v34
  %440 = vmatprep.subr.mxu0 0.0
  %441 = vmatpush1.msra.mxu0 %v33
  %442 = vmatprep.subr.mxu0 0.0
  %443 = vmatpush1.msra.mxu0 %v32
  %444 = vmatprep.subr.mxu0 0.0
  %445 = vmatpush2.msra.mxu0 0.0
  %446 = vmatprep.subr.mxu0 0.0
  %447 = vmatpush2.msra.mxu0 0.0
  %448 = vmatprep.subr.mxu0 0.0
  %449 = vmatpush2.msra.mxu0 0.0
  %450 = vmatprep.subr.mxu0 0.0
  %451 = vmatpush2.msra.mxu0 0.0
  %452 = vmatprep.subr.mxu0 0.0
  %453 = vmatpush2.msra.mxu0 0.0
  %454 = vmatprep.subr.mxu0 0.0
  %455 = vmatpush2.msra.mxu0 0.0
  %456 = vmatprep.subr.mxu0 0.0
  %457 = vmatpush2.msra.mxu0 0.0
  %458 = vmatprep.subr.mxu0 0.0
  %459 = vmatpush2.msra.mxu0 0.0
  %460 = vmatprep.subr.mxu0 0.0
  %461 = vmatpush2.msra.mxu0 0.0
  %462 = vmatprep.subr.mxu0 0.0
  %463 = vmatpush2.msra.mxu0 0.0
  %464 = vmatprep.subr.mxu0 0.0
  %465 = vmatpush2.msra.mxu0 0.0
  %466 = vmatprep.subr.mxu0 0.0
  %467 = vmatpush2.msra.mxu0 0.0
  %468 = vmatprep.subr.mxu0 0.0
  %469 = vmatpush2.msra.mxu0 0.0
  %470 = vmatprep.subr.mxu0 0.0
  %471 = vmatpush2.msra.mxu0 0.0
  %472 = vmatprep.subr.mxu0 0.0
  %473 = vmatpush2.msra.mxu0 0.0
  %474 = vmatprep.subr.mxu0 0.0
  %475 = vmatpush2.msra.mxu0 0.0
  %476 = vmatprep.mubr.f32.mxu0 0.0
  %477 = vmatmul.mubr.f32.gmra.mxu0 %v411
  %v478 = vpop.f32.mrf.mxu0
  %v479 = vadd.f32 0.0, %v478
  %v480 = vpop.f32.mrf.mxu0
  %481 = vdwg.mxu0
  %v482 = vmul.f32 %v479, 0.001953125
  %v483 = vadd.f32 %v482, 1e-05
  %v484 = vrsqrt.pop %v483
  %v486 = vsel %vm317, %v484, 0
  %488 = vmatprep.subr.mxu0 0.0
  %489 = vmatpush1.msra.mxu0 0.0
  %490 = vmatprep.subr.mxu0 0.0
  %491 = vmatpush1.msra.mxu0 0.0
  %492 = vmatprep.subr.mxu0 0.0
  %493 = vmatpush1.msra.mxu0 0.0
  %494 = vmatprep.subr.mxu0 0.0
  %495 = vmatpush1.msra.mxu0 0.0
  %496 = vmatprep.subr.mxu0 0.0
  %497 = vmatpush1.msra.mxu0 0.0
  %498 = vmatprep.subr.mxu0 0.0
  %499 = vmatpush1.msra.mxu0 0.0
  %500 = vmatprep.subr.mxu0 0.0
  %501 = vmatpush1.msra.mxu0 0.0
  %502 = vmatprep.subr.mxu0 0.0
  %503 = vmatpush1.msra.mxu0 0.0
  %504 = vmatprep.subr.mxu0 0.0
  %505 = vmatpush1.msra.mxu0 0.0
  %506 = vmatprep.subr.mxu0 0.0
  %507 = vmatpush1.msra.mxu0 0.0
  %508 = vmatprep.subr.mxu0 0.0
  %509 = vmatpush1.msra.mxu0 0.0
  %510 = vmatprep.subr.mxu0 0.0
  %511 = vmatpush1.msra.mxu0 0.0
  %512 = vmatprep.subr.mxu0 0.0
  %513 = vmatpush1.msra.mxu0 0.0
  %514 = vmatprep.subr.mxu0 0.0
  %515 = vmatpush1.msra.mxu0 0.0
  %516 = vmatprep.subr.mxu0 0.0
  %517 = vmatpush1.msra.mxu0 %v49
  %518 = vmatprep.subr.mxu0 0.0
  %519 = vmatpush1.msra.mxu0 %v48
  %520 = vmatprep.subr.mxu0 0.0
  %521 = vmatpush2.msra.mxu0 0.0
  %522 = vmatprep.subr.mxu0 0.0
  %523 = vmatpush2.msra.mxu0 0.0
  %524 = vmatprep.subr.mxu0 0.0
  %525 = vmatpush2.msra.mxu0 0.0
  %526 = vmatprep.subr.mxu0 0.0
  %527 = vmatpush2.msra.mxu0 0.0
  %528 = vmatprep.subr.mxu0 0.0
  %529 = vmatpush2.msra.mxu0 0.0
  %530 = vmatprep.subr.mxu0 0.0
  %531 = vmatpush2.msra.mxu0 0.0
  %532 = vmatprep.subr.mxu0 0.0
  %533 = vmatpush2.msra.mxu0 0.0
  %534 = vmatprep.subr.mxu0 0.0
  %535 = vmatpush2.msra.mxu0 0.0
  %536 = vmatprep.subr.mxu0 0.0
  %537 = vmatpush2.msra.mxu0 0.0
  %538 = vmatprep.subr.mxu0 0.0
  %539 = vmatpush2.msra.mxu0 0.0
  %540 = vmatprep.subr.mxu0 0.0
  %541 = vmatpush2.msra.mxu0 0.0
  %542 = vmatprep.subr.mxu0 0.0
  %543 = vmatpush2.msra.mxu0 0.0
  %544 = vmatprep.subr.mxu0 0.0
  %545 = vmatpush2.msra.mxu0 0.0
  %546 = vmatprep.subr.mxu0 0.0
  %547 = vmatpush2.msra.mxu0 0.0
  %548 = vmatprep.subr.mxu0 0.0
  %549 = vmatpush2.msra.mxu0 0.0
  %550 = vmatprep.subr.mxu0 0.0
  %551 = vmatpush2.msra.mxu0 0.0
  %552 = vmatprep.mubr.f32.mxu0 0.0
  %553 = vmatmul.mubr.f32.gmra.mxu0 %v486
  %v554 = vpop.f32.mrf.mxu0
  %v555 = vadd.f32 0.0, %v554
  %v556 = vpop.f32.mrf.mxu0
  %557 = vdwg.mxu0
  %v558 = vlaneseq
  %v559 = vshrl.u32 %v558, 7
  %v560 = vsub.s32 0, %v559
  %v561 = vrot.slane %v555, %v560
  %v562 = vmul.f32 %v395, %v561
  %v563 = vmul.f32 %v396, %v561
  %v564 = vmul.f32 %v397, %v561
  %v565 = vmul.f32 %v398, %v561
  %v566 = vmax.f32 %v562, 0.0
  %v567 = vmax.f32 %v563, 0.0
  %v568 = vmax.f32 %v564, 0.0
  %v569 = vmax.f32 %v565, 0.0
  %570 = vrot.lane.b32.xlu0 %v566, 120
  %v571 = vpop.permute.xlu0 %570
  %572 = vrot.lane.b32.xlu0 %v567, 120
  %v573 = vpop.permute.xlu0 %572
  %574 = vrot.lane.b32.xlu0 %v568, 120
  %v575 = vpop.permute.xlu0 %574
  %576 = vrot.lane.b32.xlu0 %v569, 120
  %v577 = vpop.permute.xlu0 %576
  %v578 = vmax.f32 %v566, %v571
  %v579 = vmax.f32 %v567, %v573
  %v580 = vmax.f32 %v568, %v575
  %v581 = vmax.f32 %v569, %v577
  %582 = vmatprep.subr.mxu0 0.0
  %583 = vmatpush1.msra.mxu0 %v65
  %584 = vmatprep.subr.mxu0 0.0
  %585 = vmatpush1.msra.mxu0 %v64
  %586 = vmatprep.subr.mxu0 0.0
  %587 = vmatpush1.msra.mxu0 %v63
  %588 = vmatprep.subr.mxu0 0.0
  %589 = vmatpush1.msra.mxu0 %v62
  %590 = vmatprep.subr.mxu0 0.0
  %591 = vmatpush1.msra.mxu0 %v61
  %592 = vmatprep.subr.mxu0 0.0
  %593 = vmatpush1.msra.mxu0 %v60
  %594 = vmatprep.subr.mxu0 0.0
  %595 = vmatpush1.msra.mxu0 %v59
  %596 = vmatprep.subr.mxu0 0.0
  %597 = vmatpush1.msra.mxu0 %v58
  %598 = vmatprep.subr.mxu0 0.0
  %599 = vmatpush1.msra.mxu0 %v57
  %600 = vmatprep.subr.mxu0 0.0
  %601 = vmatpush1.msra.mxu0 %v56
  %602 = vmatprep.subr.mxu0 0.0
  %603 = vmatpush1.msra.mxu0 %v55
  %604 = vmatprep.subr.mxu0 0.0
  %605 = vmatpush1.msra.mxu0 %v54
  %606 = vmatprep.subr.mxu0 0.0
  %607 = vmatpush1.msra.mxu0 %v53
  %608 = vmatprep.subr.mxu0 0.0
  %609 = vmatpush1.msra.mxu0 %v52
  %610 = vmatprep.subr.mxu0 0.0
  %611 = vmatpush1.msra.mxu0 %v51
  %612 = vmatprep.subr.mxu0 0.0
  %613 = vmatpush1.msra.mxu0 %v50
  %614 = vmatprep.subr.mxu0 0.0
  %615 = vmatpush2.msra.mxu0 0.0
  %616 = vmatprep.subr.mxu0 0.0
  %617 = vmatpush2.msra.mxu0 0.0
  %618 = vmatprep.subr.mxu0 0.0
  %619 = vmatpush2.msra.mxu0 0.0
  %620 = vmatprep.subr.mxu0 0.0
  %621 = vmatpush2.msra.mxu0 0.0
  %622 = vmatprep.subr.mxu0 0.0
  %623 = vmatpush2.msra.mxu0 0.0
  %624 = vmatprep.subr.mxu0 0.0
  %625 = vmatpush2.msra.mxu0 0.0
  %626 = vmatprep.subr.mxu0 0.0
  %627 = vmatpush2.msra.mxu0 0.0
  %628 = vmatprep.subr.mxu0 0.0
  %629 = vmatpush2.msra.mxu0 0.0
  %630 = vmatprep.subr.mxu0 0.0
  %631 = vmatpush2.msra.mxu0 0.0
  %632 = vmatprep.subr.mxu0 0.0
  %633 = vmatpush2.msra.mxu0 0.0
  %634 = vmatprep.subr.mxu0 0.0
  %635 = vmatpush2.msra.mxu0 0.0
  %636 = vmatprep.subr.mxu0 0.0
  %637 = vmatpush2.msra.mxu0 0.0
  %638 = vmatprep.subr.mxu0 0.0
  %639 = vmatpush2.msra.mxu0 0.0
  %640 = vmatprep.subr.mxu0 0.0
  %641 = vmatpush2.msra.mxu0 0.0
  %642 = vmatprep.subr.mxu0 0.0
  %643 = vmatpush2.msra.mxu0 0.0
  %644 = vmatprep.subr.mxu0 0.0
  %645 = vmatpush2.msra.mxu0 0.0
  %646 = vmatprep.mubr.f32.mxu0 0.0
  %647 = vmatmul.mubr.f32.gmra.mxu0 %v578
  %v648 = vpop.f32.mrf.mxu0
  %v649 = vadd.f32 0.0, %v648
  %v650 = vpop.f32.mrf.mxu0
  %651 = vmatprep.mubr.f32.mxu0 0.0
  %652 = vmatmul.mubr.f32.gmra.mxu0 %v579
  %v653 = vpop.f32.mrf.mxu0
  %v654 = vadd.f32 0.0, %v653
  %v655 = vpop.f32.mrf.mxu0
  %656 = vmatprep.mubr.f32.mxu0 0.0
  %657 = vmatmul.mubr.f32.gmra.mxu0 %v580
  %v658 = vpop.f32.mrf.mxu0
  %v659 = vadd.f32 0.0, %v658
  %v660 = vpop.f32.mrf.mxu0
  %661 = vmatprep.mubr.f32.mxu0 0.0
  %662 = vmatmul.mubr.f32.gmra.mxu0 %v581
  %v663 = vpop.f32.mrf.mxu0
  %v664 = vadd.f32 0.0, %v663
  %v665 = vpop.f32.mrf.mxu0
  %666 = vdwg.mxu0
  %vm667 = vcmask 523264
  %668 = vst.msk [vmem:[#allocation4] sm:$0xff] %vm667, %v649
  %669 = vst.msk [vmem:[#allocation4 + $0x8] sm:$0xff] %vm667, %v654
  %670 = vst.msk [vmem:[#allocation4 + $0x10] sm:$0xff] %vm667, %v659
  %671 = vst.msk [vmem:[#allocation4 + $0x18] sm:$0xff] %vm667, %v664
  %v672 = vld [vmem:[#allocation4] ss:$2 sm:$0xff]
  %s673 = scalar_lea.vmem [#allocation4], 16
  %v674 = vld [vmem:[%s673] ss:$2 sm:$0xff]
  %s675 = scalar_lea.vmem [#allocation4], 1
  %v676 = vld [vmem:[%s675] ss:$2 sm:$0xff]
  %s677 = scalar_lea.vmem [#allocation4], 17
  %v678 = vld [vmem:[%s677] ss:$2 sm:$0xff]
  %v679 = vmax.f32 %v672, %v676
  %v680 = vmax.f32 %v674, %v678
  %v681 = vld [vmem:[%s1 + $0x50] sm:$0xff]
  %v682 = vld [vmem:[%s1 + $0x58] sm:$0xff]
  %v683 = vld [vmem:[%s1 + $0x60] sm:$0xff]
  %v684 = vld [vmem:[%s1 + $0x68] sm:$0xff]
  %v685 = vld [vmem:[%s1 + $0x70] sm:$0xff]
  %v686 = vld [vmem:[%s1 + $0x78] sm:$0xff]
  %v687 = vld [vmem:[%s1 + $0x80] sm:$0xff]
  %v688 = vld [vmem:[%s1 + $0x88] sm:$0xff]
  %v689 = vld [vmem:[%s1 + $0x90] sm:$0xff]
  %v690 = vld [vmem:[%s1 + $0x98] sm:$0xff]
  %v691 = vld [vmem:[%s1 + $0xa0] sm:$0xff]
  %v692 = vld [vmem:[%s1 + $0xa8] sm:$0xff]
  %v693 = vld [vmem:[%s1 + $0xb0] sm:$0xff]
  %v694 = vld [vmem:[%s1 + $0xb8] sm:$0xff]
  %v695 = vld [vmem:[%s1 + $0xc0] sm:$0xff]
  %v696 = vld [vmem:[%s1 + $0xc8] sm:$0xff]
  %v697 = vld [vmem:[%s1 + $0xd0] sm:$0xff]
  %v698 = vld [vmem:[%s1 + $0xd8] sm:$0xff]
  %v699 = vld [vmem:[%s1 + $0xe0] sm:$0xff]
  %v700 = vld [vmem:[%s1 + $0xe8] sm:$0xff]
  %v701 = vld [vmem:[%s1 + $0xf0] sm:$0xff]
  %v702 = vld [vmem:[%s1 + $0xf8] sm:$0xff]
  %v703 = vld [vmem:[%s1 + $0x100] sm:$0xff]
  %v704 = vld [vmem:[%s1 + $0x108] sm:$0xff]
  %v705 = vld [vmem:[%s1 + $0x110] sm:$0xff]
  %v706 = vld [vmem:[%s1 + $0x118] sm:$0xff]
  %v707 = vld [vmem:[%s1 + $0x120] sm:$0xff]
  %v708 = vld [vmem:[%s1 + $0x128] sm:$0xff]
  %v709 = vld [vmem:[%s1 + $0x130] sm:$0xff]
  %v710 = vld [vmem:[%s1 + $0x138] sm:$0xff]
  %v711 = vld [vmem:[%s1 + $0x140] sm:$0x1]
  %v712 = vld [vmem:[%s3 + $0x80] sm:$0xff]
  %v713 = vld [vmem:[%s3 + $0x88] sm:$0xff]
  %v714 = vld [vmem:[%s3 + $0x90] sm:$0xff]
  %v715 = vld [vmem:[%s3 + $0x98] sm:$0xff]
  %v716 = vld [vmem:[%s3 + $0xa0] sm:$0xff]
  %v717 = vld [vmem:[%s3 + $0xa8] sm:$0xff]
  %v718 = vld [vmem:[%s3 + $0xb0] sm:$0xff]
  %v719 = vld [vmem:[%s3 + $0xb8] sm:$0xff]
  %v720 = vld [vmem:[%s3 + $0xc0] sm:$0xff]
  %v721 = vld [vmem:[%s3 + $0xc8] sm:$0xff]
  %v722 = vld [vmem:[%s3 + $0xd0] sm:$0xff]
  %v723 = vld [vmem:[%s3 + $0xd8] sm:$0xff]
  %v724 = vld [vmem:[%s3 + $0xe0] sm:$0xff]
  %v725 = vld [vmem:[%s3 + $0xe8] sm:$0xff]
  %v726 = vld [vmem:[%s3 + $0xf0] sm:$0xff]
  %v727 = vld [vmem:[%s3 + $0xf8] sm:$0xff]
  %v728 = vld [vmem:[%s1 + $0x148] sm:$0xff]
  %v729 = vld [vmem:[%s1 + $0x150] sm:$0xff]
  %v730 = vld [vmem:[%s2 + $0x80] sm:$0xff]
  %v731 = vld [vmem:[%s2 + $0x88] sm:$0xff]
  %v732 = vld [vmem:[%s2 + $0x90] sm:$0xff]
  %v733 = vld [vmem:[%s2 + $0x98] sm:$0xff]
  %v734 = vld [vmem:[%s2 + $0xa0] sm:$0xff]
  %v735 = vld [vmem:[%s2 + $0xa8] sm:$0xff]
  %v736 = vld [vmem:[%s2 + $0xb0] sm:$0xff]
  %v737 = vld [vmem:[%s2 + $0xb8] sm:$0xff]
  %v738 = vld [vmem:[%s2 + $0xc0] sm:$0xff]
  %v739 = vld [vmem:[%s2 + $0xc8] sm:$0xff]
  %v740 = vld [vmem:[%s2 + $0xd0] sm:$0xff]
  %v741 = vld [vmem:[%s2 + $0xd8] sm:$0xff]
  %v742 = vld [vmem:[%s2 + $0xe0] sm:$0xff]
  %v743 = vld [vmem:[%s2 + $0xe8] sm:$0xff]
  %v744 = vld [vmem:[%s2 + $0xf0] sm:$0xff]
  %v745 = vld [vmem:[%s2 + $0xf8] sm:$0xff]
  %746 = vst [vmem:[#allocation3] sm:$0xff] 0.0
  %vm747 = vcmask 916480
  %748 = vst.msk [vmem:[#allocation3 + $0x8] sm:$0xff] %vm747, 0.0
  %749 = vst [vmem:[#allocation3 + $0x10] sm:$0xff] 0.0
  %750 = vst.msk [vmem:[#allocation3 + $0x18] sm:$0xff] %vm747, 0.0
  %v753 = vrot.slane %v679, 7
  %v754 = vrot.slane %v680, 7
  %755 = vrot.lane.b32.xlu0 %v753, 8
  %v756 = vpop.permute.xlu0 %755
  %757 = vrot.lane.b32.xlu0 %v754, 8
  %v758 = vpop.permute.xlu0 %757
  %vm761 = vcmask 588865
  %762 = vst.msk [vmem:[#allocation3] sm:$0xfe] %vm761, %v756
  %763 = vst.msk [vmem:[#allocation3 + $0x10] sm:$0xfe] %vm761, %v758
  %764 = vrot.lane.b32.xlu0 %v679, 88
  %v765 = vpop.permute.xlu0 %764
  %766 = vrot.lane.b32.xlu0 %v680, 88
  %v767 = vpop.permute.xlu0 %766
  %vm770 = vcmask 1048256
  %771 = vst.msk [vmem:[#allocation3] sm:$0xff] %vm770, %v765
  %vm772 = vcmask 195584
  %773 = vst.msk [vmem:[#allocation3 + $0x8] sm:$0xff] %vm772, %v765
  %774 = vst.msk [vmem:[#allocation3 + $0x10] sm:$0xff] %vm770, %v767
  %775 = vst.msk [vmem:[#allocation3 + $0x18] sm:$0xff] %vm772, %v767
  %v776 = vrot.slane %v679, 1
  %v777 = vrot.slane %v680, 1
  %778 = vrot.lane.b32.xlu0 %v776, 40
  %v779 = vpop.permute.xlu0 %778
  %780 = vrot.lane.b32.xlu0 %v777, 40
  %v781 = vpop.permute.xlu0 %780
  %vm784 = vcmask 850240
  %785 = vst.msk [vmem:[#allocation3 + $0x8] sm:$0x7f] %vm784, %v779
  %786 = vst.msk [vmem:[#allocation3 + $0x18] sm:$0x7f] %vm784, %v781
  %v787 = vld [vmem:[#allocation3] sm:$0xff]
  %v788 = vld [vmem:[#allocation3 + $0x8] sm:$0xff]
  %v789 = vld [vmem:[#allocation3 + $0x10] sm:$0xff]
  %v790 = vld [vmem:[#allocation3 + $0x18] sm:$0xff]
  %v791 = vlaneseq
  %v792 = vshrl.u32 %v791, 7
  %v793 = vsub.s32 0, %v792
  %v794 = vrot.slane %v711, %v793
  %v796 = vsel %vm747, %v788, 0
  %v799 = vsel %vm747, %v790, 0
  %801 = vmatprep.subr.mxu0 0.0
  %802 = vmatpush1.msra.mxu0 %v696
  %803 = vmatprep.subr.mxu0 0.0
  %804 = vmatpush1.msra.mxu0 %v695
  %805 = vmatprep.subr.mxu0 0.0
  %806 = vmatpush1.msra.mxu0 %v694
  %807 = vmatprep.subr.mxu0 0.0
  %808 = vmatpush1.msra.mxu0 %v693
  %809 = vmatprep.subr.mxu0 0.0
  %810 = vmatpush1.msra.mxu0 %v692
  %811 = vmatprep.subr.mxu0 0.0
  %812 = vmatpush1.msra.mxu0 %v691
  %813 = vmatprep.subr.mxu0 0.0
  %814 = vmatpush1.msra.mxu0 %v690
  %815 = vmatprep.subr.mxu0 0.0
  %816 = vmatpush1.msra.mxu0 %v689
  %817 = vmatprep.subr.mxu0 0.0
  %818 = vmatpush1.msra.mxu0 %v688
  %819 = vmatprep.subr.mxu0 0.0
  %820 = vmatpush1.msra.mxu0 %v687
  %821 = vmatprep.subr.mxu0 0.0
  %822 = vmatpush1.msra.mxu0 %v686
  %823 = vmatprep.subr.mxu0 0.0
  %824 = vmatpush1.msra.mxu0 %v685
  %825 = vmatprep.subr.mxu0 0.0
  %826 = vmatpush1.msra.mxu0 %v684
  %827 = vmatprep.subr.mxu0 0.0
  %828 = vmatpush1.msra.mxu0 %v683
  %829 = vmatprep.subr.mxu0 0.0
  %830 = vmatpush1.msra.mxu0 %v682
  %831 = vmatprep.subr.mxu0 0.0
  %832 = vmatpush1.msra.mxu0 %v681
  %833 = vmatprep.subr.mxu0 0.0
  %834 = vmatpush2.msra.mxu0 0.0
  %835 = vmatprep.subr.mxu0 0.0
  %836 = vmatpush2.msra.mxu0 0.0
  %837 = vmatprep.subr.mxu0 0.0
  %838 = vmatpush2.msra.mxu0 %v710
  %839 = vmatprep.subr.mxu0 0.0
  %840 = vmatpush2.msra.mxu0 %v709
  %841 = vmatprep.subr.mxu0 0.0
  %842 = vmatpush2.msra.mxu0 %v708
  %843 = vmatprep.subr.mxu0 0.0
  %844 = vmatpush2.msra.mxu0 %v707
  %845 = vmatprep.subr.mxu0 0.0
  %846 = vmatpush2.msra.mxu0 %v706
  %847 = vmatprep.subr.mxu0 0.0
  %848 = vmatpush2.msra.mxu0 %v705
  %849 = vmatprep.subr.mxu0 0.0
  %850 = vmatpush2.msra.mxu0 %v704
  %851 = vmatprep.subr.mxu0 0.0
  %852 = vmatpush2.msra.mxu0 %v703
  %853 = vmatprep.subr.mxu0 0.0
  %854 = vmatpush2.msra.mxu0 %v702
  %855 = vmatprep.subr.mxu0 0.0
  %856 = vmatpush2.msra.mxu0 %v701
  %857 = vmatprep.subr.mxu0 0.0
  %858 = vmatpush2.msra.mxu0 %v700
  %859 = vmatprep.subr.mxu0 0.0
  %860 = vmatpush2.msra.mxu0 %v699
  %861 = vmatprep.subr.mxu0 0.0
  %862 = vmatpush2.msra.mxu0 %v698
  %863 = vmatprep.subr.mxu0 0.0
  %864 = vmatpush2.msra.mxu0 %v697
  %865 = vmatprep.mubr.f32.mxu0 %v796
  %866 = vmatmul.mubr.f32.gmra.mxu0 %v787
  %v867 = vpop.f32.mrf.mxu0
  %v868 = vadd.f32 %v794, %v867
  %v869 = vpop.f32.mrf.mxu0
  %870 = vmatprep.mubr.f32.mxu0 %v799
  %871 = vmatmul.mubr.f32.gmra.mxu0 %v789
  %v872 = vpop.f32.mrf.mxu0
  %v873 = vadd.f32 %v794, %v872
  %v874 = vpop.f32.mrf.mxu0
  %875 = vdwg.mxu0
  %v876 = vadd.f32 %v868, %v873
  %v877 = vrot.slane %v876, 4
  %v878 = vadd.f32 %v876, %v877
  %v879 = vrot.slane %v878, 2
  %v880 = vadd.f32 %v878, %v879
  %v881 = vrot.slane %v880, 1
  %v882 = vadd.f32 %v880, %v881
  %883 = vmatprep.subr.mxu0 0.0
  %884 = vmatpush1.msra.mxu0 %v727
  %885 = vmatprep.subr.mxu0 0.0
  %886 = vmatpush1.msra.mxu0 %v726
  %887 = vmatprep.subr.mxu0 0.0
  %888 = vmatpush1.msra.mxu0 %v725
  %889 = vmatprep.subr.mxu0 0.0
  %890 = vmatpush1.msra.mxu0 %v724
  %891 = vmatprep.subr.mxu0 0.0
  %892 = vmatpush1.msra.mxu0 %v723
  %893 = vmatprep.subr.mxu0 0.0
  %894 = vmatpush1.msra.mxu0 %v722
  %895 = vmatprep.subr.mxu0 0.0
  %896 = vmatpush1.msra.mxu0 %v721
  %897 = vmatprep.subr.mxu0 0.0
  %898 = vmatpush1.msra.mxu0 %v720
  %899 = vmatprep.subr.mxu0 0.0
  %900 = vmatpush1.msra.mxu0 %v719
  %901 = vmatprep.subr.mxu0 0.0
  %902 = vmatpush1.msra.mxu0 %v718
  %903 = vmatprep.subr.mxu0 0.0
  %904 = vmatpush1.msra.mxu0 %v717
  %905 = vmatprep.subr.mxu0 0.0
  %906 = vmatpush1.msra.mxu0 %v716
  %907 = vmatprep.subr.mxu0 0.0
  %908 = vmatpush1.msra.mxu0 %v715
  %909 = vmatprep.subr.mxu0 0.0
  %910 = vmatpush1.msra.mxu0 %v714
  %911 = vmatprep.subr.mxu0 0.0
  %912 = vmatpush1.msra.mxu0 %v713
  %913 = vmatprep.subr.mxu0 0.0
  %914 = vmatpush1.msra.mxu0 %v712
  %915 = vmatprep.subr.mxu0 0.0
  %916 = vmatpush2.msra.mxu0 0.0
  %917 = vmatprep.subr.mxu0 0.0
  %918 = vmatpush2.msra.mxu0 0.0
  %919 = vmatprep.subr.mxu0 0.0
  %920 = vmatpush2.msra.mxu0 0.0
  %921 = vmatprep.subr.mxu0 0.0
  %922 = vmatpush2.msra.mxu0 0.0
  %923 = vmatprep.subr.mxu0 0.0
  %924 = vmatpush2.msra.mxu0 0.0
  %925 = vmatprep.subr.mxu0 0.0
  %926 = vmatpush2.msra.mxu0 0.0
  %927 = vmatprep.subr.mxu0 0.0
  %928 = vmatpush2.msra.mxu0 0.0
  %929 = vmatprep.subr.mxu0 0.0
  %930 = vmatpush2.msra.mxu0 0.0
  %931 = vmatprep.subr.mxu0 0.0
  %932 = vmatpush2.msra.mxu0 0.0
  %933 = vmatprep.subr.mxu0 0.0
  %934 = vmatpush2.msra.mxu0 0.0
  %935 = vmatprep.subr.mxu0 0.0
  %936 = vmatpush2.msra.mxu0 0.0
  %937 = vmatprep.subr.mxu0 0.0
  %938 = vmatpush2.msra.mxu0 0.0
  %939 = vmatprep.subr.mxu0 0.0
  %940 = vmatpush2.msra.mxu0 0.0
  %941 = vmatprep.subr.mxu0 0.0
  %942 = vmatpush2.msra.mxu0 0.0
  %943 = vmatprep.subr.mxu0 0.0
  %944 = vmatpush2.msra.mxu0 0.0
  %945 = vmatprep.subr.mxu0 0.0
  %946 = vmatpush2.msra.mxu0 0.0
  %947 = vmatprep.mubr.f32.mxu0 0.0
  %948 = vmatmul.mubr.f32.gmra.mxu0 %v882
  %v949 = vpop.f32.mrf.mxu0
  %v950 = vadd.f32 0.0, %v949
  %v951 = vpop.f32.mrf.mxu0
  %952 = vdwg.mxu0
  %v953 = vmul.f32 %v950, 0.0078125
  %v955 = vsel %vm317, %v953, 0
  %957 = vmatprep.subr.mxu0 0.0
  %958 = vmatpush1.msra.mxu0 0.0
  %959 = vmatprep.subr.mxu0 0.0
  %960 = vmatpush1.msra.mxu0 0.0
  %961 = vmatprep.subr.mxu0 0.0
  %962 = vmatpush1.msra.mxu0 0.0
  %963 = vmatprep.subr.mxu0 0.0
  %964 = vmatpush1.msra.mxu0 0.0
  %965 = vmatprep.subr.mxu0 0.0
  %966 = vmatpush1.msra.mxu0 0.0
  %967 = vmatprep.subr.mxu0 0.0
  %968 = vmatpush1.msra.mxu0 0.0
  %969 = vmatprep.subr.mxu0 0.0
  %970 = vmatpush1.msra.mxu0 0.0
  %971 = vmatprep.subr.mxu0 0.0
  %972 = vmatpush1.msra.mxu0 0.0
  %973 = vmatprep.subr.mxu0 0.0
  %974 = vmatpush1.msra.mxu0 0.0
  %975 = vmatprep.subr.mxu0 0.0
  %976 = vmatpush1.msra.mxu0 0.0
  %977 = vmatprep.subr.mxu0 0.0
  %978 = vmatpush1.msra.mxu0 0.0
  %979 = vmatprep.subr.mxu0 0.0
  %980 = vmatpush1.msra.mxu0 0.0
  %981 = vmatprep.subr.mxu0 0.0
  %982 = vmatpush1.msra.mxu0 0.0
  %983 = vmatprep.subr.mxu0 0.0
  %984 = vmatpush1.msra.mxu0 0.0
  %985 = vmatprep.subr.mxu0 0.0
  %986 = vmatpush1.msra.mxu0 %v729
  %987 = vmatprep.subr.mxu0 0.0
  %988 = vmatpush1.msra.mxu0 %v728
  %989 = vmatprep.subr.mxu0 0.0
  %990 = vmatpush2.msra.mxu0 0.0
  %991 = vmatprep.subr.mxu0 0.0
  %992 = vmatpush2.msra.mxu0 0.0
  %993 = vmatprep.subr.mxu0 0.0
  %994 = vmatpush2.msra.mxu0 0.0
  %995 = vmatprep.subr.mxu0 0.0
  %996 = vmatpush2.msra.mxu0 0.0
  %997 = vmatprep.subr.mxu0 0.0
  %998 = vmatpush2.msra.mxu0 0.0
  %999 = vmatprep.subr.mxu0 0.0
  %1000 = vmatpush2.msra.mxu0 0.0
  %1001 = vmatprep.subr.mxu0 0.0
  %1002 = vmatpush2.msra.mxu0 0.0
  %1003 = vmatprep.subr.mxu0 0.0
  %1004 = vmatpush2.msra.mxu0 0.0
  %1005 = vmatprep.subr.mxu0 0.0
  %1006 = vmatpush2.msra.mxu0 0.0
  %1007 = vmatprep.subr.mxu0 0.0
  %1008 = vmatpush2.msra.mxu0 0.0
  %1009 = vmatprep.subr.mxu0 0.0
  %1010 = vmatpush2.msra.mxu0 0.0
  %1011 = vmatprep.subr.mxu0 0.0
  %1012 = vmatpush2.msra.mxu0 0.0
  %1013 = vmatprep.subr.mxu0 0.0
  %1014 = vmatpush2.msra.mxu0 0.0
  %1015 = vmatprep.subr.mxu0 0.0
  %1016 = vmatpush2.msra.mxu0 0.0
  %1017 = vmatprep.subr.mxu0 0.0
  %1018 = vmatpush2.msra.mxu0 0.0
  %1019 = vmatprep.subr.mxu0 0.0
  %1020 = vmatpush2.msra.mxu0 0.0
  %1021 = vmatprep.mubr.f32.mxu0 0.0
  %1022 = vmatmul.mubr.f32.gmra.mxu0 %v955
  %v1023 = vpop.f32.mrf.mxu0
  %v1024 = vadd.f32 0.0, %v1023
  %v1025 = vpop.f32.mrf.mxu0
  %1026 = vdwg.mxu0
  %v1027 = vlaneseq
  %v1028 = vshrl.u32 %v1027, 7
  %v1029 = vsub.s32 0, %v1028
  %v1030 = vrot.slane %v1024, %v1029
  %v1031 = vsub.f32 %v868, %v1030
  %v1032 = vsub.f32 %v873, %v1030
  %v1033 = vmul.f32 %v1031, %v1031
  %v1034 = vmul.f32 %v1032, %v1032
  %v1035 = vadd.f32 %v1033, %v1034
  %v1036 = vrot.slane %v1035, 4
  %v1037 = vadd.f32 %v1035, %v1036
  %v1038 = vrot.slane %v1037, 2
  %v1039 = vadd.f32 %v1037, %v1038
  %v1040 = vrot.slane %v1039, 1
  %v1041 = vadd.f32 %v1039, %v1040
  %1042 = vmatprep.subr.mxu0 0.0
  %1043 = vmatpush1.msra.mxu0 %v727
  %1044 = vmatprep.subr.mxu0 0.0
  %1045 = vmatpush1.msra.mxu0 %v726
  %1046 = vmatprep.subr.mxu0 0.0
  %1047 = vmatpush1.msra.mxu0 %v725
  %1048 = vmatprep.subr.mxu0 0.0
  %1049 = vmatpush1.msra.mxu0 %v724
  %1050 = vmatprep.subr.mxu0 0.0
  %1051 = vmatpush1.msra.mxu0 %v723
  %1052 = vmatprep.subr.mxu0 0.0
  %1053 = vmatpush1.msra.mxu0 %v722
  %1054 = vmatprep.subr.mxu0 0.0
  %1055 = vmatpush1.msra.mxu0 %v721
  %1056 = vmatprep.subr.mxu0 0.0
  %1057 = vmatpush1.msra.mxu0 %v720
  %1058 = vmatprep.subr.mxu0 0.0
  %1059 = vmatpush1.msra.mxu0 %v719
  %1060 = vmatprep.subr.mxu0 0.0
  %1061 = vmatpush1.msra.mxu0 %v718
  %1062 = vmatprep.subr.mxu0 0.0
  %1063 = vmatpush1.msra.mxu0 %v717
  %1064 = vmatprep.subr.mxu0 0.0
  %1065 = vmatpush1.msra.mxu0 %v716
  %1066 = vmatprep.subr.mxu0 0.0
  %1067 = vmatpush1.msra.mxu0 %v715
  %1068 = vmatprep.subr.mxu0 0.0
  %1069 = vmatpush1.msra.mxu0 %v714
  %1070 = vmatprep.subr.mxu0 0.0
  %1071 = vmatpush1.msra.mxu0 %v713
  %1072 = vmatprep.subr.mxu0 0.0
  %1073 = vmatpush1.msra.mxu0 %v712
  %1074 = vmatprep.subr.mxu0 0.0
  %1075 = vmatpush2.msra.mxu0 0.0
  %1076 = vmatprep.subr.mxu0 0.0
  %1077 = vmatpush2.msra.mxu0 0.0
  %1078 = vmatprep.subr.mxu0 0.0
  %1079 = vmatpush2.msra.mxu0 0.0
  %1080 = vmatprep.subr.mxu0 0.0
  %1081 = vmatpush2.msra.mxu0 0.0
  %1082 = vmatprep.subr.mxu0 0.0
  %1083 = vmatpush2.msra.mxu0 0.0
  %1084 = vmatprep.subr.mxu0 0.0
  %1085 = vmatpush2.msra.mxu0 0.0
  %1086 = vmatprep.subr.mxu0 0.0
  %1087 = vmatpush2.msra.mxu0 0.0
  %1088 = vmatprep.subr.mxu0 0.0
  %1089 = vmatpush2.msra.mxu0 0.0
  %1090 = vmatprep.subr.mxu0 0.0
  %1091 = vmatpush2.msra.mxu0 0.0
  %1092 = vmatprep.subr.mxu0 0.0
  %1093 = vmatpush2.msra.mxu0 0.0
  %1094 = vmatprep.subr.mxu0 0.0
  %1095 = vmatpush2.msra.mxu0 0.0
  %1096 = vmatprep.subr.mxu0 0.0
  %1097 = vmatpush2.msra.mxu0 0.0
  %1098 = vmatprep.subr.mxu0 0.0
  %1099 = vmatpush2.msra.mxu0 0.0
  %1100 = vmatprep.subr.mxu0 0.0
  %1101 = vmatpush2.msra.mxu0 0.0
  %1102 = vmatprep.subr.mxu0 0.0
  %1103 = vmatpush2.msra.mxu0 0.0
  %1104 = vmatprep.subr.mxu0 0.0
  %1105 = vmatpush2.msra.mxu0 0.0
  %1106 = vmatprep.mubr.f32.mxu0 0.0
  %1107 = vmatmul.mubr.f32.gmra.mxu0 %v1041
  %v1108 = vpop.f32.mrf.mxu0
  %v1109 = vadd.f32 0.0, %v1108
  %v1110 = vpop.f32.mrf.mxu0
  %1111 = vdwg.mxu0
  %v1112 = vmul.f32 %v1109, 0.0078125
  %v1113 = vadd.f32 %v1112, 1e-05
  %v1114 = vrsqrt.pop %v1113
  %v1116 = vsel %vm317, %v1114, 0
  %1118 = vmatprep.subr.mxu0 0.0
  %1119 = vmatpush1.msra.mxu0 0.0
  %1120 = vmatprep.subr.mxu0 0.0
  %1121 = vmatpush1.msra.mxu0 0.0
  %1122 = vmatprep.subr.mxu0 0.0
  %1123 = vmatpush1.msra.mxu0 0.0
  %1124 = vmatprep.subr.mxu0 0.0
  %1125 = vmatpush1.msra.mxu0 0.0
  %1126 = vmatprep.subr.mxu0 0.0
  %1127 = vmatpush1.msra.mxu0 0.0
  %1128 = vmatprep.subr.mxu0 0.0
  %1129 = vmatpush1.msra.mxu0 0.0
  %1130 = vmatprep.subr.mxu0 0.0
  %1131 = vmatpush1.msra.mxu0 0.0
  %1132 = vmatprep.subr.mxu0 0.0
  %1133 = vmatpush1.msra.mxu0 0.0
  %1134 = vmatprep.subr.mxu0 0.0
  %1135 = vmatpush1.msra.mxu0 0.0
  %1136 = vmatprep.subr.mxu0 0.0
  %1137 = vmatpush1.msra.mxu0 0.0
  %1138 = vmatprep.subr.mxu0 0.0
  %1139 = vmatpush1.msra.mxu0 0.0
  %1140 = vmatprep.subr.mxu0 0.0
  %1141 = vmatpush1.msra.mxu0 0.0
  %1142 = vmatprep.subr.mxu0 0.0
  %1143 = vmatpush1.msra.mxu0 0.0
  %1144 = vmatprep.subr.mxu0 0.0
  %1145 = vmatpush1.msra.mxu0 0.0
  %1146 = vmatprep.subr.mxu0 0.0
  %1147 = vmatpush1.msra.mxu0 %v729
  %1148 = vmatprep.subr.mxu0 0.0
  %1149 = vmatpush1.msra.mxu0 %v728
  %1150 = vmatprep.subr.mxu0 0.0
  %1151 = vmatpush2.msra.mxu0 0.0
  %1152 = vmatprep.subr.mxu0 0.0
  %1153 = vmatpush2.msra.mxu0 0.0
  %1154 = vmatprep.subr.mxu0 0.0
  %1155 = vmatpush2.msra.mxu0 0.0
  %1156 = vmatprep.subr.mxu0 0.0
  %1157 = vmatpush2.msra.mxu0 0.0
  %1158 = vmatprep.subr.mxu0 0.0
  %1159 = vmatpush2.msra.mxu0 0.0
  %1160 = vmatprep.subr.mxu0 0.0
  %1161 = vmatpush2.msra.mxu0 0.0
  %1162 = vmatprep.subr.mxu0 0.0
  %1163 = vmatpush2.msra.mxu0 0.0
  %1164 = vmatprep.subr.mxu0 0.0
  %1165 = vmatpush2.msra.mxu0 0.0
  %1166 = vmatprep.subr.mxu0 0.0
  %1167 = vmatpush2.msra.mxu0 0.0
  %1168 = vmatprep.subr.mxu0 0.0
  %1169 = vmatpush2.msra.mxu0 0.0
  %1170 = vmatprep.subr.mxu0 0.0
  %1171 = vmatpush2.msra.mxu0 0.0
  %1172 = vmatprep.subr.mxu0 0.0
  %1173 = vmatpush2.msra.mxu0 0.0
  %1174 = vmatprep.subr.mxu0 0.0
  %1175 = vmatpush2.msra.mxu0 0.0
  %1176 = vmatprep.subr.mxu0 0.0
  %1177 = vmatpush2.msra.mxu0 0.0
  %1178 = vmatprep.subr.mxu0 0.0
  %1179 = vmatpush2.msra.mxu0 0.0
  %1180 = vmatprep.subr.mxu0 0.0
  %1181 = vmatpush2.msra.mxu0 0.0
  %1182 = vmatprep.mubr.f32.mxu0 0.0
  %1183 = vmatmul.mubr.f32.gmra.mxu0 %v1116
  %v1184 = vpop.f32.mrf.mxu0
  %v1185 = vadd.f32 0.0, %v1184
  %v1186 = vpop.f32.mrf.mxu0
  %1187 = vdwg.mxu0
  %v1188 = vlaneseq
  %v1189 = vshrl.u32 %v1188, 7
  %v1190 = vsub.s32 0, %v1189
  %v1191 = vrot.slane %v1185, %v1190
  %v1192 = vmul.f32 %v1031, %v1191
  %v1193 = vmul.f32 %v1032, %v1191
  %v1194 = vmax.f32 %v1192, 0.0
  %v1195 = vmax.f32 %v1193, 0.0
  %1196 = vrot.lane.b32.xlu0 %v1194, 112
  %v1197 = vpop.permute.xlu0 %1196
  %1198 = vrot.lane.b32.xlu0 %v1195, 112
  %v1199 = vpop.permute.xlu0 %1198
  %v1200 = vmax.f32 %v1194, %v1197
  %v1201 = vmax.f32 %v1195, %v1199
  %1202 = vmatprep.subr.mxu0 0.0
  %1203 = vmatpush1.msra.mxu0 %v745
  %1204 = vmatprep.subr.mxu0 0.0
  %1205 = vmatpush1.msra.mxu0 %v744
  %1206 = vmatprep.subr.mxu0 0.0
  %1207 = vmatpush1.msra.mxu0 %v743
  %1208 = vmatprep.subr.mxu0 0.0
  %1209 = vmatpush1.msra.mxu0 %v742
  %1210 = vmatprep.subr.mxu0 0.0
  %1211 = vmatpush1.msra.mxu0 %v741
  %1212 = vmatprep.subr.mxu0 0.0
  %1213 = vmatpush1.msra.mxu0 %v740
  %1214 = vmatprep.subr.mxu0 0.0
  %1215 = vmatpush1.msra.mxu0 %v739
  %1216 = vmatprep.subr.mxu0 0.0
  %1217 = vmatpush1.msra.mxu0 %v738
  %1218 = vmatprep.subr.mxu0 0.0
  %1219 = vmatpush1.msra.mxu0 %v737
  %1220 = vmatprep.subr.mxu0 0.0
  %1221 = vmatpush1.msra.mxu0 %v736
  %1222 = vmatprep.subr.mxu0 0.0
  %1223 = vmatpush1.msra.mxu0 %v735
  %1224 = vmatprep.subr.mxu0 0.0
  %1225 = vmatpush1.msra.mxu0 %v734
  %1226 = vmatprep.subr.mxu0 0.0
  %1227 = vmatpush1.msra.mxu0 %v733
  %1228 = vmatprep.subr.mxu0 0.0
  %1229 = vmatpush1.msra.mxu0 %v732
  %1230 = vmatprep.subr.mxu0 0.0
  %1231 = vmatpush1.msra.mxu0 %v731
  %1232 = vmatprep.subr.mxu0 0.0
  %1233 = vmatpush1.msra.mxu0 %v730
  %1234 = vmatprep.subr.mxu0 0.0
  %1235 = vmatpush2.msra.mxu0 0.0
  %1236 = vmatprep.subr.mxu0 0.0
  %1237 = vmatpush2.msra.mxu0 0.0
  %1238 = vmatprep.subr.mxu0 0.0
  %1239 = vmatpush2.msra.mxu0 0.0
  %1240 = vmatprep.subr.mxu0 0.0
  %1241 = vmatpush2.msra.mxu0 0.0
  %1242 = vmatprep.subr.mxu0 0.0
  %1243 = vmatpush2.msra.mxu0 0.0
  %1244 = vmatprep.subr.mxu0 0.0
  %1245 = vmatpush2.msra.mxu0 0.0
  %1246 = vmatprep.subr.mxu0 0.0
  %1247 = vmatpush2.msra.mxu0 0.0
  %1248 = vmatprep.subr.mxu0 0.0
  %1249 = vmatpush2.msra.mxu0 0.0
  %1250 = vmatprep.subr.mxu0 0.0
  %1251 = vmatpush2.msra.mxu0 0.0
  %1252 = vmatprep.subr.mxu0 0.0
  %1253 = vmatpush2.msra.mxu0 0.0
  %1254 = vmatprep.subr.mxu0 0.0
  %1255 = vmatpush2.msra.mxu0 0.0
  %1256 = vmatprep.subr.mxu0 0.0
  %1257 = vmatpush2.msra.mxu0 0.0
  %1258 = vmatprep.subr.mxu0 0.0
  %1259 = vmatpush2.msra.mxu0 0.0
  %1260 = vmatprep.subr.mxu0 0.0
  %1261 = vmatpush2.msra.mxu0 0.0
  %1262 = vmatprep.subr.mxu0 0.0
  %1263 = vmatpush2.msra.mxu0 0.0
  %1264 = vmatprep.subr.mxu0 0.0
  %1265 = vmatpush2.msra.mxu0 0.0
  %1266 = vmatprep.mubr.f32.mxu0 0.0
  %1267 = vmatmul.mubr.f32.gmra.mxu0 %v1200
  %v1268 = vpop.f32.mrf.mxu0
  %v1269 = vadd.f32 0.0, %v1268
  %v1270 = vpop.f32.mrf.mxu0
  %1271 = vmatprep.mubr.f32.mxu0 0.0
  %1272 = vmatmul.mubr.f32.gmra.mxu0 %v1201
  %v1273 = vpop.f32.mrf.mxu0
  %v1274 = vadd.f32 0.0, %v1273
  %v1275 = vpop.f32.mrf.mxu0
  %1276 = vdwg.mxu0
  %1277 = vst.msk [vmem:[#allocation5] sm:$0xff] %vm667, %v1269
  %1278 = vst.msk [vmem:[#allocation5 + $0x8] sm:$0xff] %vm667, %v1274
  %v1279 = vld [vmem:[#allocation5] ss:$8 sm:$0x3]
  %s1280 = scalar_lea.vmem [#allocation5], 1
  %v1281 = vld [vmem:[%s1280] ss:$8 sm:$0x3]
  %v1282 = vmax.f32 %v1279, %v1281
  %v1283 = vld [vmem:[%s4] sm:$0xff]
  %v1284 = vld [vmem:[%s4 + $0x8] sm:$0xff]
  %v1285 = vld [vmem:[%s4 + $0x10] sm:$0xff]
  %v1286 = vld [vmem:[%s4 + $0x18] sm:$0xff]
  %v1287 = vld [vmem:[%s4 + $0x20] sm:$0xff]
  %v1288 = vld [vmem:[%s4 + $0x28] sm:$0xff]
  %v1289 = vld [vmem:[%s4 + $0x30] sm:$0xff]
  %v1290 = vld [vmem:[%s4 + $0x38] sm:$0xff]
  %s1291 = scalar_lea.vmem [#allocation5], 2
  %v1292 = vld [vmem:[%s1291] ss:$8 sm:$0x3]
  %s1293 = scalar_lea.vmem [#allocation5], 3
  %v1294 = vld [vmem:[%s1293] ss:$8 sm:$0x3]
  %v1295 = vmax.f32 %v1292, %v1294
  %v1296 = vld [vmem:[%s4 + $0x40] sm:$0xff]
  %v1297 = vld [vmem:[%s4 + $0x48] sm:$0xff]
  %v1298 = vld [vmem:[%s4 + $0x50] sm:$0xff]
  %v1299 = vld [vmem:[%s4 + $0x58] sm:$0xff]
  %v1300 = vld [vmem:[%s4 + $0x60] sm:$0xff]
  %v1301 = vld [vmem:[%s4 + $0x68] sm:$0xff]
  %v1302 = vld [vmem:[%s4 + $0x70] sm:$0xff]
  %v1303 = vld [vmem:[%s4 + $0x78] sm:$0xff]
  %v1305 = vsel %vm667, %v1295, 0
  %1307 = vmatprep.subr.mxu0 0.0
  %1308 = vmatpush1.msra.mxu0 0.0
  %1309 = vmatprep.subr.mxu0 0.0
  %1310 = vmatpush1.msra.mxu0 0.0
  %1311 = vmatprep.subr.mxu0 0.0
  %1312 = vmatpush1.msra.mxu0 0.0
  %1313 = vmatprep.subr.mxu0 0.0
  %1314 = vmatpush1.msra.mxu0 0.0
  %1315 = vmatprep.subr.mxu0 0.0
  %1316 = vmatpush1.msra.mxu0 0.0
  %1317 = vmatprep.subr.mxu0 0.0
  %1318 = vmatpush1.msra.mxu0 0.0
  %1319 = vmatprep.subr.mxu0 0.0
  %1320 = vmatpush1.msra.mxu0 0.0
  %1321 = vmatprep.subr.mxu0 0.0
  %1322 = vmatpush1.msra.mxu0 0.0
  %1323 = vmatprep.subr.mxu0 0.0
  %1324 = vmatpush1.msra.mxu0 %v1303
  %1325 = vmatprep.subr.mxu0 0.0
  %1326 = vmatpush1.msra.mxu0 %v1302
  %1327 = vmatprep.subr.mxu0 0.0
  %1328 = vmatpush1.msra.mxu0 %v1301
  %1329 = vmatprep.subr.mxu0 0.0
  %1330 = vmatpush1.msra.mxu0 %v1300
  %1331 = vmatprep.subr.mxu0 0.0
  %1332 = vmatpush1.msra.mxu0 %v1299
  %1333 = vmatprep.subr.mxu0 0.0
  %1334 = vmatpush1.msra.mxu0 %v1298
  %1335 = vmatprep.subr.mxu0 0.0
  %1336 = vmatpush1.msra.mxu0 %v1297
  %1337 = vmatprep.subr.mxu0 0.0
  %1338 = vmatpush1.msra.mxu0 %v1296
  %1339 = vmatprep.subr.mxu0 0.0
  %1340 = vmatpush2.msra.mxu0 0.0
  %1341 = vmatprep.subr.mxu0 0.0
  %1342 = vmatpush2.msra.mxu0 0.0
  %1343 = vmatprep.subr.mxu0 0.0
  %1344 = vmatpush2.msra.mxu0 0.0
  %1345 = vmatprep.subr.mxu0 0.0
  %1346 = vmatpush2.msra.mxu0 0.0
  %1347 = vmatprep.subr.mxu0 0.0
  %1348 = vmatpush2.msra.mxu0 0.0
  %1349 = vmatprep.subr.mxu0 0.0
  %1350 = vmatpush2.msra.mxu0 0.0
  %1351 = vmatprep.subr.mxu0 0.0
  %1352 = vmatpush2.msra.mxu0 0.0
  %1353 = vmatprep.subr.mxu0 0.0
  %1354 = vmatpush2.msra.mxu0 0.0
  %1355 = vmatprep.subr.mxu0 0.0
  %1356 = vmatpush2.msra.mxu0 0.0
  %1357 = vmatprep.subr.mxu0 0.0
  %1358 = vmatpush2.msra.mxu0 0.0
  %1359 = vmatprep.subr.mxu0 0.0
  %1360 = vmatpush2.msra.mxu0 0.0
  %1361 = vmatprep.subr.mxu0 0.0
  %1362 = vmatpush2.msra.mxu0 0.0
  %1363 = vmatprep.subr.mxu0 0.0
  %1364 = vmatpush2.msra.mxu0 0.0
  %1365 = vmatprep.subr.mxu0 0.0
  %1366 = vmatpush2.msra.mxu0 0.0
  %1367 = vmatprep.subr.mxu0 0.0
  %1368 = vmatpush2.msra.mxu0 0.0
  %1369 = vmatprep.subr.mxu0 0.0
  %1370 = vmatpush2.msra.mxu0 0.0
  %1371 = vmatprep.mubr.f32.mxu0 0.0
  %1372 = vmatmul.mubr.f32.gmra.mxu0 %v1305
  %v1373 = vpop.f32.mrf.mxu0
  %v1374 = vadd.f32 0.0, %v1373
  %v1375 = vpop.f32.mrf.mxu0
  %1376 = vdwg.mxu0
  %v1378 = vsel %vm667, %v1282, 0
  %1380 = vmatprep.subr.mxu0 0.0
  %1381 = vmatpush1.msra.mxu0 0.0
  %1382 = vmatprep.subr.mxu0 0.0
  %1383 = vmatpush1.msra.mxu0 0.0
  %1384 = vmatprep.subr.mxu0 0.0
  %1385 = vmatpush1.msra.mxu0 0.0
  %1386 = vmatprep.subr.mxu0 0.0
  %1387 = vmatpush1.msra.mxu0 0.0
  %1388 = vmatprep.subr.mxu0 0.0
  %1389 = vmatpush1.msra.mxu0 0.0
  %1390 = vmatprep.subr.mxu0 0.0
  %1391 = vmatpush1.msra.mxu0 0.0
  %1392 = vmatprep.subr.mxu0 0.0
  %1393 = vmatpush1.msra.mxu0 0.0
  %1394 = vmatprep.subr.mxu0 0.0
  %1395 = vmatpush1.msra.mxu0 0.0
  %1396 = vmatprep.subr.mxu0 0.0
  %1397 = vmatpush1.msra.mxu0 %v1290
  %1398 = vmatprep.subr.mxu0 0.0
  %1399 = vmatpush1.msra.mxu0 %v1289
  %1400 = vmatprep.subr.mxu0 0.0
  %1401 = vmatpush1.msra.mxu0 %v1288
  %1402 = vmatprep.subr.mxu0 0.0
  %1403 = vmatpush1.msra.mxu0 %v1287
  %1404 = vmatprep.subr.mxu0 0.0
  %1405 = vmatpush1.msra.mxu0 %v1286
  %1406 = vmatprep.subr.mxu0 0.0
  %1407 = vmatpush1.msra.mxu0 %v1285
  %1408 = vmatprep.subr.mxu0 0.0
  %1409 = vmatpush1.msra.mxu0 %v1284
  %1410 = vmatprep.subr.mxu0 0.0
  %1411 = vmatpush1.msra.mxu0 %v1283
  %1412 = vmatprep.subr.mxu0 0.0
  %1413 = vmatpush2.msra.mxu0 0.0
  %1414 = vmatprep.subr.mxu0 0.0
  %1415 = vmatpush2.msra.mxu0 0.0
  %1416 = vmatprep.subr.mxu0 0.0
  %1417 = vmatpush2.msra.mxu0 0.0
  %1418 = vmatprep.subr.mxu0 0.0
  %1419 = vmatpush2.msra.mxu0 0.0
  %1420 = vmatprep.subr.mxu0 0.0
  %1421 = vmatpush2.msra.mxu0 0.0
  %1422 = vmatprep.subr.mxu0 0.0
  %1423 = vmatpush2.msra.mxu0 0.0
  %1424 = vmatprep.subr.mxu0 0.0
  %1425 = vmatpush2.msra.mxu0 0.0
  %1426 = vmatprep.subr.mxu0 0.0
  %1427 = vmatpush2.msra.mxu0 0.0
  %1428 = vmatprep.subr.mxu0 0.0
  %1429 = vmatpush2.msra.mxu0 0.0
  %1430 = vmatprep.subr.mxu0 0.0
  %1431 = vmatpush2.msra.mxu0 0.0
  %1432 = vmatprep.subr.mxu0 0.0
  %1433 = vmatpush2.msra.mxu0 0.0
  %1434 = vmatprep.subr.mxu0 0.0
  %1435 = vmatpush2.msra.mxu0 0.0
  %1436 = vmatprep.subr.mxu0 0.0
  %1437 = vmatpush2.msra.mxu0 0.0
  %1438 = vmatprep.subr.mxu0 0.0
  %1439 = vmatpush2.msra.mxu0 0.0
  %1440 = vmatprep.subr.mxu0 0.0
  %1441 = vmatpush2.msra.mxu0 0.0
  %1442 = vmatprep.subr.mxu0 0.0
  %1443 = vmatpush2.msra.mxu0 0.0
  %1444 = vmatprep.mubr.f32.mxu0 0.0
  %1445 = vmatmul.mubr.f32.gmra.mxu0 %v1378
  %v1446 = vpop.f32.mrf.mxu0
  %v1447 = vadd.f32 %v1374, %v1446
  %v1448 = vpop.f32.mrf.mxu0
  %1449 = vdwg.mxu0
  %s1450 = scalar_lea.vmem [#allocation5], 4
  %v1451 = vld [vmem:[%s1450] ss:$8 sm:$0x3]
  %s1452 = scalar_lea.vmem [#allocation5], 5
  %v1453 = vld [vmem:[%s1452] ss:$8 sm:$0x3]
  %v1454 = vmax.f32 %v1451, %v1453
  %v1455 = vld [vmem:[%s4 + $0x80] sm:$0xff]
  %v1456 = vld [vmem:[%s4 + $0x88] sm:$0xff]
  %v1457 = vld [vmem:[%s4 + $0x90] sm:$0xff]
  %v1458 = vld [vmem:[%s4 + $0x98] sm:$0xff]
  %v1459 = vld [vmem:[%s4 + $0xa0] sm:$0xff]
  %v1460 = vld [vmem:[%s4 + $0xa8] sm:$0xff]
  %v1461 = vld [vmem:[%s4 + $0xb0] sm:$0xff]
  %v1462 = vld [vmem:[%s4 + $0xb8] sm:$0xff]
  %v1464 = vsel %vm667, %v1454, 0
  %1466 = vmatprep.subr.mxu0 0.0
  %1467 = vmatpush1.msra.mxu0 0.0
  %1468 = vmatprep.subr.mxu0 0.0
  %1469 = vmatpush1.msra.mxu0 0.0
  %1470 = vmatprep.subr.mxu0 0.0
  %1471 = vmatpush1.msra.mxu0 0.0
  %1472 = vmatprep.subr.mxu0 0.0
  %1473 = vmatpush1.msra.mxu0 0.0
  %1474 = vmatprep.subr.mxu0 0.0
  %1475 = vmatpush1.msra.mxu0 0.0
  %1476 = vmatprep.subr.mxu0 0.0
  %1477 = vmatpush1.msra.mxu0 0.0
  %1478 = vmatprep.subr.mxu0 0.0
  %1479 = vmatpush1.msra.mxu0 0.0
  %1480 = vmatprep.subr.mxu0 0.0
  %1481 = vmatpush1.msra.mxu0 0.0
  %1482 = vmatprep.subr.mxu0 0.0
  %1483 = vmatpush1.msra.mxu0 %v1462
  %1484 = vmatprep.subr.mxu0 0.0
  %1485 = vmatpush1.msra.mxu0 %v1461
  %1486 = vmatprep.subr.mxu0 0.0
  %1487 = vmatpush1.msra.mxu0 %v1460
  %1488 = vmatprep.subr.mxu0 0.0
  %1489 = vmatpush1.msra.mxu0 %v1459
  %1490 = vmatprep.subr.mxu0 0.0
  %1491 = vmatpush1.msra.mxu0 %v1458
  %1492 = vmatprep.subr.mxu0 0.0
  %1493 = vmatpush1.msra.mxu0 %v1457
  %1494 = vmatprep.subr.mxu0 0.0
  %1495 = vmatpush1.msra.mxu0 %v1456
  %1496 = vmatprep.subr.mxu0 0.0
  %1497 = vmatpush1.msra.mxu0 %v1455
  %1498 = vmatprep.subr.mxu0 0.0
  %1499 = vmatpush2.msra.mxu0 0.0
  %1500 = vmatprep.subr.mxu0 0.0
  %1501 = vmatpush2.msra.mxu0 0.0
  %1502 = vmatprep.subr.mxu0 0.0
  %1503 = vmatpush2.msra.mxu0 0.0
  %1504 = vmatprep.subr.mxu0 0.0
  %1505 = vmatpush2.msra.mxu0 0.0
  %1506 = vmatprep.subr.mxu0 0.0
  %1507 = vmatpush2.msra.mxu0 0.0
  %1508 = vmatprep.subr.mxu0 0.0
  %1509 = vmatpush2.msra.mxu0 0.0
  %1510 = vmatprep.subr.mxu0 0.0
  %1511 = vmatpush2.msra.mxu0 0.0
  %1512 = vmatprep.subr.mxu0 0.0
  %1513 = vmatpush2.msra.mxu0 0.0
  %1514 = vmatprep.subr.mxu0 0.0
  %1515 = vmatpush2.msra.mxu0 0.0
  %1516 = vmatprep.subr.mxu0 0.0
  %1517 = vmatpush2.msra.mxu0 0.0
  %1518 = vmatprep.subr.mxu0 0.0
  %1519 = vmatpush2.msra.mxu0 0.0
  %1520 = vmatprep.subr.mxu0 0.0
  %1521 = vmatpush2.msra.mxu0 0.0
  %1522 = vmatprep.subr.mxu0 0.0
  %1523 = vmatpush2.msra.mxu0 0.0
  %1524 = vmatprep.subr.mxu0 0.0
  %1525 = vmatpush2.msra.mxu0 0.0
  %1526 = vmatprep.subr.mxu0 0.0
  %1527 = vmatpush2.msra.mxu0 0.0
  %1528 = vmatprep.subr.mxu0 0.0
  %1529 = vmatpush2.msra.mxu0 0.0
  %1530 = vmatprep.mubr.f32.mxu0 0.0
  %1531 = vmatmul.mubr.f32.gmra.mxu0 %v1464
  %v1532 = vpop.f32.mrf.mxu0
  %v1533 = vadd.f32 0.0, %v1532
  %v1534 = vpop.f32.mrf.mxu0
  %1535 = vdwg.mxu0
  %v1536 = vadd.f32 %v1447, %v1533
  %s1537 = scalar_lea.vmem [#allocation5], 6
  %v1538 = vld [vmem:[%s1537] ss:$8 sm:$0x3]
  %s1539 = scalar_lea.vmem [#allocation5], 7
  %v1540 = vld [vmem:[%s1539] ss:$8 sm:$0x3]
  %v1541 = vmax.f32 %v1538, %v1540
  %v1542 = vld [vmem:[%s4 + $0xc0] sm:$0xff]
  %v1543 = vld [vmem:[%s4 + $0xc8] sm:$0xff]
  %v1544 = vld [vmem:[%s4 + $0xd0] sm:$0xff]
  %v1545 = vld [vmem:[%s4 + $0xd8] sm:$0xff]
  %v1546 = vld [vmem:[%s4 + $0xe0] sm:$0xff]
  %v1547 = vld [vmem:[%s4 + $0xe8] sm:$0xff]
  %v1548 = vld [vmem:[%s4 + $0xf0] sm:$0xff]
  %v1549 = vld [vmem:[%s4 + $0xf8] sm:$0xff]
  %v1551 = vsel %vm667, %v1541, 0
  %1553 = vmatprep.subr.mxu0 0.0
  %1554 = vmatpush1.msra.mxu0 0.0
  %1555 = vmatprep.subr.mxu0 0.0
  %1556 = vmatpush1.msra.mxu0 0.0
  %1557 = vmatprep.subr.mxu0 0.0
  %1558 = vmatpush1.msra.mxu0 0.0
  %1559 = vmatprep.subr.mxu0 0.0
  %1560 = vmatpush1.msra.mxu0 0.0
  %1561 = vmatprep.subr.mxu0 0.0
  %1562 = vmatpush1.msra.mxu0 0.0
  %1563 = vmatprep.subr.mxu0 0.0
  %1564 = vmatpush1.msra.mxu0 0.0
  %1565 = vmatprep.subr.mxu0 0.0
  %1566 = vmatpush1.msra.mxu0 0.0
  %1567 = vmatprep.subr.mxu0 0.0
  %1568 = vmatpush1.msra.mxu0 0.0
  %1569 = vmatprep.subr.mxu0 0.0
  %1570 = vmatpush1.msra.mxu0 %v1549
  %1571 = vmatprep.subr.mxu0 0.0
  %1572 = vmatpush1.msra.mxu0 %v1548
  %1573 = vmatprep.subr.mxu0 0.0
  %1574 = vmatpush1.msra.mxu0 %v1547
  %1575 = vmatprep.subr.mxu0 0.0
  %1576 = vmatpush1.msra.mxu0 %v1546
  %1577 = vmatprep.subr.mxu0 0.0
  %1578 = vmatpush1.msra.mxu0 %v1545
  %1579 = vmatprep.subr.mxu0 0.0
  %1580 = vmatpush1.msra.mxu0 %v1544
  %1581 = vmatprep.subr.mxu0 0.0
  %1582 = vmatpush1.msra.mxu0 %v1543
  %1583 = vmatprep.subr.mxu0 0.0
  %1584 = vmatpush1.msra.mxu0 %v1542
  %1585 = vmatprep.subr.mxu0 0.0
  %1586 = vmatpush2.msra.mxu0 0.0
  %1587 = vmatprep.subr.mxu0 0.0
  %1588 = vmatpush2.msra.mxu0 0.0
  %1589 = vmatprep.subr.mxu0 0.0
  %1590 = vmatpush2.msra.mxu0 0.0
  %1591 = vmatprep.subr.mxu0 0.0
  %1592 = vmatpush2.msra.mxu0 0.0
  %1593 = vmatprep.subr.mxu0 0.0
  %1594 = vmatpush2.msra.mxu0 0.0
  %1595 = vmatprep.subr.mxu0 0.0
  %1596 = vmatpush2.msra.mxu0 0.0
  %1597 = vmatprep.subr.mxu0 0.0
  %1598 = vmatpush2.msra.mxu0 0.0
  %1599 = vmatprep.subr.mxu0 0.0
  %1600 = vmatpush2.msra.mxu0 0.0
  %1601 = vmatprep.subr.mxu0 0.0
  %1602 = vmatpush2.msra.mxu0 0.0
  %1603 = vmatprep.subr.mxu0 0.0
  %1604 = vmatpush2.msra.mxu0 0.0
  %1605 = vmatprep.subr.mxu0 0.0
  %1606 = vmatpush2.msra.mxu0 0.0
  %1607 = vmatprep.subr.mxu0 0.0
  %1608 = vmatpush2.msra.mxu0 0.0
  %1609 = vmatprep.subr.mxu0 0.0
  %1610 = vmatpush2.msra.mxu0 0.0
  %1611 = vmatprep.subr.mxu0 0.0
  %1612 = vmatpush2.msra.mxu0 0.0
  %1613 = vmatprep.subr.mxu0 0.0
  %1614 = vmatpush2.msra.mxu0 0.0
  %1615 = vmatprep.subr.mxu0 0.0
  %1616 = vmatpush2.msra.mxu0 0.0
  %1617 = vmatprep.mubr.f32.mxu0 0.0
  %1618 = vmatmul.mubr.f32.gmra.mxu0 %v1551
  %v1619 = vpop.f32.mrf.mxu0
  %v1620 = vadd.f32 0.0, %v1619
  %v1621 = vpop.f32.mrf.mxu0
  %1622 = vdwg.mxu0
  %v1623 = vadd.f32 %v1536, %v1620
  %v1624 = vld [vmem:[%s4 + $0x100] sm:$0x1]
  %v1625 = vlaneseq
  %v1626 = vshrl.u32 %v1625, 7
  %v1627 = vsub.s32 0, %v1626
  %v1628 = vrot.slane %v1624, %v1627
  %v1629 = vadd.f32 %v1623, %v1628
  %v1630 = vmax.f32 %v1629, 0.0
  %v1631 = vld [vmem:[%s1 + $0x158] sm:$0xff]
  %v1632 = vld [vmem:[%s1 + $0x160] sm:$0xff]
  %v1633 = vld [vmem:[%s1 + $0x168] sm:$0xff]
  %v1634 = vld [vmem:[%s1 + $0x170] sm:$0xff]
  %v1635 = vld [vmem:[%s1 + $0x178] sm:$0x1]
  %v1636 = vlaneseq
  %v1637 = vshrl.u32 %v1636, 7
  %v1638 = vsub.s32 0, %v1637
  %v1639 = vrot.slane %v1635, %v1638
  %vm1640 = vcmask 261120
  %v1642 = vsel %vm1640, %v1630, 0
  %1644 = vmatprep.subr.mxu0 0.0
  %1645 = vmatpush1.msra.mxu0 0.0
  %1646 = vmatprep.subr.mxu0 0.0
  %1647 = vmatpush1.msra.mxu0 0.0
  %1648 = vmatprep.subr.mxu0 0.0
  %1649 = vmatpush1.msra.mxu0 0.0
  %1650 = vmatprep.subr.mxu0 0.0
  %1651 = vmatpush1.msra.mxu0 0.0
  %1652 = vmatprep.subr.mxu0 0.0
  %1653 = vmatpush1.msra.mxu0 0.0
  %1654 = vmatprep.subr.mxu0 0.0
  %1655 = vmatpush1.msra.mxu0 0.0
  %1656 = vmatprep.subr.mxu0 0.0
  %1657 = vmatpush1.msra.mxu0 0.0
  %1658 = vmatprep.subr.mxu0 0.0
  %1659 = vmatpush1.msra.mxu0 0.0
  %1660 = vmatprep.subr.mxu0 0.0
  %1661 = vmatpush1.msra.mxu0 0.0
  %1662 = vmatprep.subr.mxu0 0.0
  %1663 = vmatpush1.msra.mxu0 0.0
  %1664 = vmatprep.subr.mxu0 0.0
  %1665 = vmatpush1.msra.mxu0 0.0
  %1666 = vmatprep.subr.mxu0 0.0
  %1667 = vmatpush1.msra.mxu0 0.0
  %1668 = vmatprep.subr.mxu0 0.0
  %1669 = vmatpush1.msra.mxu0 %v1634
  %1670 = vmatprep.subr.mxu0 0.0
  %1671 = vmatpush1.msra.mxu0 %v1633
  %1672 = vmatprep.subr.mxu0 0.0
  %1673 = vmatpush1.msra.mxu0 %v1632
  %1674 = vmatprep.subr.mxu0 0.0
  %1675 = vmatpush1.msra.mxu0 %v1631
  %1676 = vmatprep.subr.mxu0 0.0
  %1677 = vmatpush2.msra.mxu0 0.0
  %1678 = vmatprep.subr.mxu0 0.0
  %1679 = vmatpush2.msra.mxu0 0.0
  %1680 = vmatprep.subr.mxu0 0.0
  %1681 = vmatpush2.msra.mxu0 0.0
  %1682 = vmatprep.subr.mxu0 0.0
  %1683 = vmatpush2.msra.mxu0 0.0
  %1684 = vmatprep.subr.mxu0 0.0
  %1685 = vmatpush2.msra.mxu0 0.0
  %1686 = vmatprep.subr.mxu0 0.0
  %1687 = vmatpush2.msra.mxu0 0.0
  %1688 = vmatprep.subr.mxu0 0.0
  %1689 = vmatpush2.msra.mxu0 0.0
  %1690 = vmatprep.subr.mxu0 0.0
  %1691 = vmatpush2.msra.mxu0 0.0
  %1692 = vmatprep.subr.mxu0 0.0
  %1693 = vmatpush2.msra.mxu0 0.0
  %1694 = vmatprep.subr.mxu0 0.0
  %1695 = vmatpush2.msra.mxu0 0.0
  %1696 = vmatprep.subr.mxu0 0.0
  %1697 = vmatpush2.msra.mxu0 0.0
  %1698 = vmatprep.subr.mxu0 0.0
  %1699 = vmatpush2.msra.mxu0 0.0
  %1700 = vmatprep.subr.mxu0 0.0
  %1701 = vmatpush2.msra.mxu0 0.0
  %1702 = vmatprep.subr.mxu0 0.0
  %1703 = vmatpush2.msra.mxu0 0.0
  %1704 = vmatprep.subr.mxu0 0.0
  %1705 = vmatpush2.msra.mxu0 0.0
  %1706 = vmatprep.subr.mxu0 0.0
  %1707 = vmatpush2.msra.mxu0 0.0
  %1708 = vmatprep.mubr.f32.mxu0 0.0
  %1709 = vmatmul.mubr.f32.gmra.mxu0 %v1642
  %v1710 = vpop.f32.mrf.mxu0
  %v1711 = vadd.f32 %v1639, %v1710
  %v1712 = vpop.f32.mrf.mxu0
  %1713 = vdwg.mxu0
  %vm1714 = vcmask 33792
  %v1715 = vsel %vm1714, %v1711, -inf
  %1716 = vmax.xlane.f32.xlu0 %v1715
  %v1717 = vpop.xlane.xlu0 %1716
  %v1718 = vsub.f32 %v1711, %v1717
  %v1719 = vmul.f32 %v1718, 1.442695
  %v1720 = vpow.pop %v1719
  %1721 = vst [vmem:[%s5] sm:$0x3] %v1711
  %v1722 = vsel %vm1714, %v1720, 0.0
  %1723 = vadd.xlane.f32.xlu0 %v1722
  %v1724 = vpop.xlane.xlu0 %1723
  %v1725 = vrcp.pop %v1724
  %v1726 = vmul.f32 %v1720, %v1725
  %1727 = vst.msk [vmem:[%s5] sm:$0x3] %vm1714, %v1726
  %v1728 = vsub.f32 0.0, %v1711
  %v1729 = vmul.f32 %v1728, 1.442695
  %v1730 = vpow.pop %v1729
  %v1731 = vadd.f32 %v1730, 1.0
  %v1732 = vrcp.pop %v1731
  %v1733 = vmul.f32 9.9999, %v1732
  %v1734 = vadd.f32 %v1733, 0.0001
  %vm1735 = vcmask 484792
  %1736 = vst.msk [vmem:[%s5] sm:$0x3] %vm1735, %v1734
  // Predicated region
  $region22: #{mln_cnn_forward.1} parent=0 // pred_check
    _
  $region23: #{mln_cnn_forward.1} parent=0 // pred_check_branch
    %1738 = sbr.rel (0) target = $region25
  $region24: #{mln_cnn_forward.1} parent=0 // pred_region
    _
  $region25: #{mln_cnn_forward.1} parent=0 // pred_fallthru
    _
  // Predicated region
  $region26: #{mln_cnn_forward.1} parent=0 // pred_check
    _
  $region27: #{mln_cnn_forward.1} parent=0 // pred_check_branch
    %1740 = sbr.rel (0) target = $region29
  $region28: #{mln_cnn_forward.1} parent=0 // pred_region
    _
  $region29: #{mln_cnn_forward.1} parent=0 // pred_fallthru
    _

</llo_original>
